<compile_context>
chip_gen: v5e
topology: v5e:2x2
jax: 0.10.0
libtpu: 0.0.40
codegen_flags: <defaults>
</compile_context>

<pallas_src>
import jax
import jax.numpy as jnp
from jax.experimental import pallas as pl
from jax.experimental.pallas import tpu as pltpu


# ----------------------------- Pallas kernel -------------------------------


def basic_block_kernel(x_ref, w1_ref, b1_ref, w2_ref, b2_ref, out_ref, h1_ref):
    # x_ref:   (Nb, H+2, W*C)  bf16 lane-dense, H-padded activations
    # wX_ref:  (3, W*C, W*C)   bf16 block-banded conv weights (BN scale folded)
    # bX_ref:  (1, W*C)        f32 folded BN bias, tiled across W
    # out_ref: (Nb, H, W*C)    bf16
    # h1_ref:  (Nb, H+2, W*C)  bf16 VMEM scratch: H-padded conv2 input
    nb, hp2, wc = x_ref.shape
    H = hp2 - 2
    M = nb * H                       # all images stacked into the MXU M dim

    def conv3x3_band(src_ref, w_ref):
        # src_ref: (Nb, H+2, WC) bf16 (already H-padded).  One K=WC band
        # matmul per vertical tap; the 3 horizontal taps + W zero padding are
        # folded into the block-banded weights, so no in-kernel im2col.
        acc = jnp.zeros((M, wc), jnp.float32)
        for dy in range(3):                                 # static, unrolled
            a = src_ref[:, dy:dy + H, :].reshape(M, wc)     # bf16, no recast
            acc = acc + jnp.dot(a, w_ref[dy],
                                preferred_element_type=jnp.float32)
        return acc

    # conv1 -> bn1 (bias; scale folded into the weights) -> relu
    h1 = jnp.maximum(conv3x3_band(x_ref, w1_ref) + b1_ref[...], 0.0)

    # H-pad h1 per image into the bf16 scratch (single cast at the store).
    # Boundary rows are re-zeroed every step (2*Nb short rows), so nothing
    # depends on cross-step scratch state — stays correct if the "parallel"
    # batch axis is sharded across TensorCores.
    zrow = jnp.zeros((nb, 1, wc), h1_ref.dtype)
    h1_ref[:, 0:1, :] = zrow
    h1_ref[:, H + 1:H + 2, :] = zrow
    h1_ref[:, 1:H + 1, :] = h1.reshape(nb, H, wc).astype(h1_ref.dtype)

    # conv2 -> bn2 (bias)
    h2 = conv3x3_band(h1_ref, w2_ref) + b2_ref[...]

    # residual add in f32 (stride=1, downsample=None) -> relu
    resid = x_ref[:, 1:H + 1, :].reshape(M, wc).astype(jnp.float32)
    out = jnp.maximum(h2 + resid, 0.0)
    out_ref[...] = out.reshape(nb, H, wc).astype(out_ref.dtype)


# ------------------------------- wrapper ------------------------------------


def _band_weights(w_hwio, scale, W):
    """Fold BN scale + horizontal taps + W zero-padding into (3, W*C, W*C)."""
    ws = w_hwio * scale                                  # scale output channels
    bands = []
    for dy in range(3):
        band = sum(
            jnp.kron(jnp.eye(W, k=1 - dx, dtype=ws.dtype), ws[dy, dx])
            for dx in range(3))
        bands.append(band)
    return jnp.stack(bands)                              # (3, W*C, W*C)


def _pick_block_n(N, H, WC, *, vmem_budget_bytes=24 << 20, max_nb=256):
    """Largest divisor of N fitting a rough per-step VMEM budget, keeping the
    grid >= 2 steps whenever possible (so v7x can shard across 2 TCs)."""
    per_img = (2 * (H + 2) * WC * 2      # bf16 input block, double-buffered
               + 2 * H * WC * 2          # bf16 output block, double-buffered
               + (H + 2) * WC * 2        # bf16 padded-h1 scratch
               + 3 * H * WC * 4)         # f32 intermediates / spill headroom
    cap = int(max(1, min(max_nb, vmem_budget_bytes // per_img)))
    if N >= 2:
        cap = min(cap, N // 2)           # keep at least 2 grid steps
    cap = max(1, min(cap, N))
    for nb in range(cap, 0, -1):
        if N % nb == 0:
            return nb
    return 1


def basic_block_pallas(x_nchw, params, *, block_n=None):
    """BasicBlock forward (eval-mode BN, stride=1, downsample=None).
    x_nchw: (N, C, H, W) float32."""
    w1, g1, beta1, m1, v1, w2, g2, beta2, m2, v2 = params
    eps = 1e-5

    # Fold BN (eval mode) into per-channel scale / bias.
    s1 = g1 * jax.lax.rsqrt(v1 + eps)
    b1 = beta1 - m1 * s1
    s2 = g2 * jax.lax.rsqrt(v2 + eps)
    b2 = beta2 - m2 * s2

    N, C, H, W = x_nchw.shape
    WC = W * C

    # NCHW -> NHWC -> lane-dense (N, H+2, W*C), H zero-padded, bf16 at the HBM
    # boundary (convs already run at bf16 MXU precision; halves in/out DMA).
    # TODO(synk): in a full model this layout change (and the inverse below)
    # should happen once at the model boundary, not per block.
    x = jnp.transpose(x_nchw, (0, 2, 3, 1)).reshape(N, H, WC)
    x = jnp.pad(x, ((0, 0), (1, 1), (0, 0))).astype(jnp.bfloat16)

    # BN scale folded into conv weights; weights packed block-banded, bf16.
    wb1 = _band_weights(w1, s1, W).astype(jnp.bfloat16)
    wb2 = _band_weights(w2, s2, W).astype(jnp.bfloat16)
    b1_lane = jnp.tile(b1, W).reshape(1, WC).astype(jnp.float32)
    b2_lane = jnp.tile(b2, W).reshape(1, WC).astype(jnp.float32)

    if block_n is None:
        block_n = _pick_block_n(N, H, WC)
    assert N % block_n == 0

    out = pl.pallas_call(
        basic_block_kernel,
        out_shape=jax.ShapeDtypeStruct((N, H, WC), jnp.bfloat16),
        grid_spec=pltpu.PrefetchScalarGridSpec(
            num_scalar_prefetch=0,
            grid=(N // block_n,),
            in_specs=[
                pl.BlockSpec((block_n, H + 2, WC), lambda i: (i, 0, 0)),
                pl.BlockSpec((3, WC, WC), lambda i: (0, 0, 0)),
                pl.BlockSpec((1, WC), lambda i: (0, 0)),
                pl.BlockSpec((3, WC, WC), lambda i: (0, 0, 0)),
                pl.BlockSpec((1, WC), lambda i: (0, 0)),
            ],
            out_specs=pl.BlockSpec((block_n, H, WC), lambda i: (i, 0, 0)),
            scratch_shapes=[pltpu.VMEM((block_n, H + 2, WC), jnp.bfloat16)],
        ),
        compiler_params=pltpu.CompilerParams(
            dimension_semantics=("parallel",),
            vmem_limit_bytes=32 * 1024 * 1024),
    )(x, wb1, b1_lane, wb2, b2_lane)

    out = out.astype(jnp.float32)
    return jnp.transpose(out.reshape(N, H, W, C), (0, 3, 1, 2))  # -> NCHW


# ------------------------------ reference -----------------------------------


def basic_block_ref(x_nchw, params):
    w1, g1, beta1, m1, v1, w2, g2, beta2, m2, v2 = params
    eps = 1e-5
    s1 = g1 / jnp.sqrt(v1 + eps)
    b1 = beta1 - m1 * s1
    s2 = g2 / jnp.sqrt(v2 + eps)
    b2 = beta2 - m2 * s2

    x = jnp.transpose(x_nchw, (0, 2, 3, 1))
    dn = ("NHWC", "HWIO", "NHWC")
    h = jax.lax.conv_general_dilated(x, w1, (1, 1), ((1, 1), (1, 1)),
                                     dimension_numbers=dn)
    h = jnp.maximum(h * s1 + b1, 0.0)
    h = jax.lax.conv_general_dilated(h, w2, (1, 1), ((1, 1), (1, 1)),
                                     dimension_numbers=dn)
    h = h * s2 + b2
    out = jnp.maximum(h + x, 0.0)
    return jnp.transpose(out, (0, 3, 1, 2))


# -------------------------------- main ---------------------------------------


if __name__ == "__main__":
    N, C, H, W = 8, 8, 16, 16                            # inplanes = planes = 8
    key = jax.random.PRNGKey(0)
    keys = jax.random.split(key, 11)

    fan_in = C * 3 * 3
    std = 1.0 / (fan_in ** 0.5)
    x = jax.random.normal(keys[0], (N, C, H, W), jnp.float32)

    # conv weights in HWIO layout (kh, kw, Cin, Cout), no bias (matches conv3x3)
    w1 = jax.random.normal(keys[1], (3, 3, C, C), jnp.float32) * std
    w2 = jax.random.normal(keys[2], (3, 3, C, C), jnp.float32) * std
    # BatchNorm2d parameters + running stats (deterministic, nontrivial)
    g1 = 1.0 + 0.1 * jax.random.normal(keys[3], (C,), jnp.float32)
    beta1 = 0.1 * jax.random.normal(keys[4], (C,), jnp.float32)
    m1 = 0.1 * jax.random.normal(keys[5], (C,), jnp.float32)
    v1 = jnp.abs(jax.random.normal(keys[6], (C,), jnp.float32)) + 0.5
    g2 = 1.0 + 0.1 * jax.random.normal(keys[7], (C,), jnp.float32)
    beta2 = 0.1 * jax.random.normal(keys[8], (C,), jnp.float32)
    m2 = 0.1 * jax.random.normal(keys[9], (C,), jnp.float32)
    v2 = jnp.abs(jax.random.normal(keys[10], (C,), jnp.float32)) + 0.5

    params = (w1, g1, beta1, m1, v1, w2, g2, beta2, m2, v2)

    out = jax.jit(basic_block_pallas)(x, params)
    out = jax.block_until_ready(out)

    ref = basic_block_ref(x, params)
    assert out.shape == (N, C, H, W)
    # bf16 activations/weights at the MXU + bf16 HBM boundary (f32 accumulate,
    # f32 bias/residual) -> tolerance loosened accordingly.
    max_err = jnp.max(jnp.abs(out - ref))
    assert jnp.allclose(out, ref, rtol=2e-2, atol=2e-2), (
        f"max abs err {max_err}")

    print("KERNEL_OK")
</pallas_src>

<mosaic_0001>
module attributes {stable_mosaic.version = 11 : i64} {
  func.func @basic_block_kernel(%arg0: i32, %arg1: memref<4x18x128xbf16, #tpu.memory_space<vmem>>, %arg2: memref<3x128x128xbf16, #tpu.memory_space<vmem>>, %arg3: memref<1x128xf32, #tpu.memory_space<vmem>>, %arg4: memref<3x128x128xbf16, #tpu.memory_space<vmem>>, %arg5: memref<1x128xf32, #tpu.memory_space<vmem>>, %arg6: memref<4x16x128xbf16, #tpu.memory_space<vmem>>, %arg7: memref<4x18x128xbf16, #tpu.memory_space<vmem>>) attributes {dimension_semantics = [#tpu.dimension_semantics<parallel>], iteration_bounds = array<i64: 2>, scalar_prefetch = 0 : i64, scratch_operands = 1 : i64, tpu.core_type = #tpu.core_type<tc>, window_params = [{transform_indices = @transform_0, window_bounds = array<i64: 4, 18, 128>}, {pipeline_mode = #tpu.pipeline_mode<synchronous>, transform_indices = @transform_1, window_bounds = array<i64: 3, 128, 128>}, {pipeline_mode = #tpu.pipeline_mode<synchronous>, transform_indices = @transform_2, window_bounds = array<i64: 1, 128>}, {pipeline_mode = #tpu.pipeline_mode<synchronous>, transform_indices = @transform_3, window_bounds = array<i64: 3, 128, 128>}, {pipeline_mode = #tpu.pipeline_mode<synchronous>, transform_indices = @transform_4, window_bounds = array<i64: 1, 128>}, {transform_indices = @transform_5, window_bounds = array<i64: 4, 16, 128>}]} {
    %cst = arith.constant 0.000000e+00 : f32
    %0 = vector.broadcast %cst : f32 to vector<64x128xf32>
    %c0 = arith.constant 0 : index
    %c0_0 = arith.constant 0 : index
    %c0_1 = arith.constant 0 : index
    %1 = vector.load %arg1[%c0, %c0_0, %c0_1] : memref<4x18x128xbf16, #tpu.memory_space<vmem>>, vector<4x16x128xbf16>
    %2 = vector.shape_cast %1 : vector<4x16x128xbf16> to vector<64x128xbf16>
    %c0_2 = arith.constant 0 : index
    %c0_3 = arith.constant 0 : index
    %c0_4 = arith.constant 0 : index
    %3 = vector.load %arg2[%c0_2, %c0_3, %c0_4] : memref<3x128x128xbf16, #tpu.memory_space<vmem>>, vector<1x128x128xbf16>
    %4 = vector.shape_cast %3 : vector<1x128x128xbf16> to vector<128x128xbf16>
    %cst_5 = arith.constant dense<0.000000e+00> : vector<64x128xf32>
    %5 = tpu.matmul %2, %4, %cst_5 {dimension_numbers = #tpu.dot_dimension_numbers<[1], [0], [0], [1], [0, 0, 1, 1], [], []>} : vector<64x128xbf16>, vector<128x128xbf16>, vector<64x128xf32> -> vector<64x128xf32>
    %6 = arith.addf %0, %5 : vector<64x128xf32>
    %c0_6 = arith.constant 0 : index
    %c1 = arith.constant 1 : index
    %c0_7 = arith.constant 0 : index
    %7 = vector.load %arg1[%c0_6, %c1, %c0_7] : memref<4x18x128xbf16, #tpu.memory_space<vmem>>, vector<4x16x128xbf16>
    %8 = vector.shape_cast %7 : vector<4x16x128xbf16> to vector<64x128xbf16>
    %c1_8 = arith.constant 1 : index
    %c0_9 = arith.constant 0 : index
    %c0_10 = arith.constant 0 : index
    %9 = vector.load %arg2[%c1_8, %c0_9, %c0_10] : memref<3x128x128xbf16, #tpu.memory_space<vmem>>, vector<1x128x128xbf16>
    %10 = vector.shape_cast %9 : vector<1x128x128xbf16> to vector<128x128xbf16>
    %cst_11 = arith.constant dense<0.000000e+00> : vector<64x128xf32>
    %11 = tpu.matmul %8, %10, %cst_11 {dimension_numbers = #tpu.dot_dimension_numbers<[1], [0], [0], [1], [0, 0, 1, 1], [], []>} : vector<64x128xbf16>, vector<128x128xbf16>, vector<64x128xf32> -> vector<64x128xf32>
    %12 = arith.addf %6, %11 : vector<64x128xf32>
    %c0_12 = arith.constant 0 : index
    %c2 = arith.constant 2 : index
    %c0_13 = arith.constant 0 : index
    %13 = vector.load %arg1[%c0_12, %c2, %c0_13] : memref<4x18x128xbf16, #tpu.memory_space<vmem>>, vector<4x16x128xbf16>
    %14 = vector.shape_cast %13 : vector<4x16x128xbf16> to vector<64x128xbf16>
    %c2_14 = arith.constant 2 : index
    %c0_15 = arith.constant 0 : index
    %c0_16 = arith.constant 0 : index
    %15 = vector.load %arg2[%c2_14, %c0_15, %c0_16] : memref<3x128x128xbf16, #tpu.memory_space<vmem>>, vector<1x128x128xbf16>
    %16 = vector.shape_cast %15 : vector<1x128x128xbf16> to vector<128x128xbf16>
    %cst_17 = arith.constant dense<0.000000e+00> : vector<64x128xf32>
    %17 = tpu.matmul %14, %16, %cst_17 {dimension_numbers = #tpu.dot_dimension_numbers<[1], [0], [0], [1], [0, 0, 1, 1], [], []>} : vector<64x128xbf16>, vector<128x128xbf16>, vector<64x128xf32> -> vector<64x128xf32>
    %18 = arith.addf %12, %17 : vector<64x128xf32>
    %c0_18 = arith.constant 0 : index
    %c0_19 = arith.constant 0 : index
    %19 = vector.load %arg3[%c0_18, %c0_19] : memref<1x128xf32, #tpu.memory_space<vmem>>, vector<1x128xf32>
    %20 = vector.broadcast %19 : vector<1x128xf32> to vector<64x128xf32>
    %21 = arith.addf %18, %20 : vector<64x128xf32>
    %cst_20 = arith.constant 0.000000e+00 : f32
    %22 = vector.broadcast %cst_20 : f32 to vector<64x128xf32>
    %23 = arith.maximumf %21, %22 : vector<64x128xf32>
    %cst_21 = arith.constant 0.000000e+00 : bf16
    %24 = vector.broadcast %cst_21 : bf16 to vector<4x1x128xbf16>
    %c0_22 = arith.constant 0 : index
    %c0_23 = arith.constant 0 : index
    %c0_24 = arith.constant 0 : index
    %25 = vector.load %arg7[%c0_22, %c0_23, %c0_24] : memref<4x18x128xbf16, #tpu.memory_space<vmem>>, vector<4x1x128xbf16>
    tpu.vector_store %arg7[%c0_22, %c0_23, %c0_24], %24 {strides = array<i32>} : memref<4x18x128xbf16, #tpu.memory_space<vmem>>, vector<4x1x128xbf16>,
    %c0_25 = arith.constant 0 : index
    %c17 = arith.constant 17 : index
    %c0_26 = arith.constant 0 : index
    %26 = vector.load %arg7[%c0_25, %c17, %c0_26] : memref<4x18x128xbf16, #tpu.memory_space<vmem>>, vector<4x1x128xbf16>
    tpu.vector_store %arg7[%c0_25, %c17, %c0_26], %24 {strides = array<i32>} : memref<4x18x128xbf16, #tpu.memory_space<vmem>>, vector<4x1x128xbf16>,
    %27 = vector.shape_cast %23 : vector<64x128xf32> to vector<4x16x128xf32>
    %28 = arith.truncf %27 : vector<4x16x128xf32> to vector<4x16x128xbf16>
    %c0_27 = arith.constant 0 : index
    %c1_28 = arith.constant 1 : index
    %c0_29 = arith.constant 0 : index
    %29 = vector.load %arg7[%c0_27, %c1_28, %c0_29] : memref<4x18x128xbf16, #tpu.memory_space<vmem>>, vector<4x16x128xbf16>
    tpu.vector_store %arg7[%c0_27, %c1_28, %c0_29], %28 {strides = array<i32>} : memref<4x18x128xbf16, #tpu.memory_space<vmem>>, vector<4x16x128xbf16>,
    %cst_30 = arith.constant 0.000000e+00 : f32
    %30 = vector.broadcast %cst_30 : f32 to vector<64x128xf32>
    %c0_31 = arith.constant 0 : index
    %c0_32 = arith.constant 0 : index
    %c0_33 = arith.constant 0 : index
    %31 = vector.load %arg7[%c0_31, %c0_32, %c0_33] : memref<4x18x128xbf16, #tpu.memory_space<vmem>>, vector<4x16x128xbf16>
    %32 = vector.shape_cast %31 : vector<4x16x128xbf16> to vector<64x128xbf16>
    %c0_34 = arith.constant 0 : index
    %c0_35 = arith.constant 0 : index
    %c0_36 = arith.constant 0 : index
    %33 = vector.load %arg4[%c0_34, %c0_35, %c0_36] : memref<3x128x128xbf16, #tpu.memory_space<vmem>>, vector<1x128x128xbf16>
    %34 = vector.shape_cast %33 : vector<1x128x128xbf16> to vector<128x128xbf16>
    %cst_37 = arith.constant dense<0.000000e+00> : vector<64x128xf32>
    %35 = tpu.matmul %32, %34, %cst_37 {dimension_numbers = #tpu.dot_dimension_numbers<[1], [0], [0], [1], [0, 0, 1, 1], [], []>} : vector<64x128xbf16>, vector<128x128xbf16>, vector<64x128xf32> -> vector<64x128xf32>
    %36 = arith.addf %30, %35 : vector<64x128xf32>
    %c0_38 = arith.constant 0 : index
    %c1_39 = arith.constant 1 : index
    %c0_40 = arith.constant 0 : index
    %37 = vector.load %arg7[%c0_38, %c1_39, %c0_40] : memref<4x18x128xbf16, #tpu.memory_space<vmem>>, vector<4x16x128xbf16>
    %38 = vector.shape_cast %37 : vector<4x16x128xbf16> to vector<64x128xbf16>
    %c1_41 = arith.constant 1 : index
    %c0_42 = arith.constant 0 : index
    %c0_43 = arith.constant 0 : index
    %39 = vector.load %arg4[%c1_41, %c0_42, %c0_43] : memref<3x128x128xbf16, #tpu.memory_space<vmem>>, vector<1x128x128xbf16>
    %40 = vector.shape_cast %39 : vector<1x128x128xbf16> to vector<128x128xbf16>
    %cst_44 = arith.constant dense<0.000000e+00> : vector<64x128xf32>
    %41 = tpu.matmul %38, %40, %cst_44 {dimension_numbers = #tpu.dot_dimension_numbers<[1], [0], [0], [1], [0, 0, 1, 1], [], []>} : vector<64x128xbf16>, vector<128x128xbf16>, vector<64x128xf32> -> vector<64x128xf32>
    %42 = arith.addf %36, %41 : vector<64x128xf32>
    %c0_45 = arith.constant 0 : index
    %c2_46 = arith.constant 2 : index
    %c0_47 = arith.constant 0 : index
    %43 = vector.load %arg7[%c0_45, %c2_46, %c0_47] : memref<4x18x128xbf16, #tpu.memory_space<vmem>>, vector<4x16x128xbf16>
    %44 = vector.shape_cast %43 : vector<4x16x128xbf16> to vector<64x128xbf16>
    %c2_48 = arith.constant 2 : index
    %c0_49 = arith.constant 0 : index
    %c0_50 = arith.constant 0 : index
    %45 = vector.load %arg4[%c2_48, %c0_49, %c0_50] : memref<3x128x128xbf16, #tpu.memory_space<vmem>>, vector<1x128x128xbf16>
    %46 = vector.shape_cast %45 : vector<1x128x128xbf16> to vector<128x128xbf16>
    %cst_51 = arith.constant dense<0.000000e+00> : vector<64x128xf32>
    %47 = tpu.matmul %44, %46, %cst_51 {dimension_numbers = #tpu.dot_dimension_numbers<[1], [0], [0], [1], [0, 0, 1, 1], [], []>} : vector<64x128xbf16>, vector<128x128xbf16>, vector<64x128xf32> -> vector<64x128xf32>
    %48 = arith.addf %42, %47 : vector<64x128xf32>
    %c0_52 = arith.constant 0 : index
    %c0_53 = arith.constant 0 : index
    %49 = vector.load %arg5[%c0_52, %c0_53] : memref<1x128xf32, #tpu.memory_space<vmem>>, vector<1x128xf32>
    %50 = vector.broadcast %49 : vector<1x128xf32> to vector<64x128xf32>
    %51 = arith.addf %48, %50 : vector<64x128xf32>
    %c0_54 = arith.constant 0 : index
    %c1_55 = arith.constant 1 : index
    %c0_56 = arith.constant 0 : index
    %52 = vector.load %arg1[%c0_54, %c1_55, %c0_56] : memref<4x18x128xbf16, #tpu.memory_space<vmem>>, vector<4x16x128xbf16>
    %53 = vector.shape_cast %52 : vector<4x16x128xbf16> to vector<64x128xbf16>
    %54 = arith.extf %53 : vector<64x128xbf16> to vector<64x128xf32>
    %55 = arith.addf %51, %54 : vector<64x128xf32>
    %cst_57 = arith.constant 0.000000e+00 : f32
    %56 = vector.broadcast %cst_57 : f32 to vector<64x128xf32>
    %57 = arith.maximumf %55, %56 : vector<64x128xf32>
    %58 = vector.shape_cast %57 : vector<64x128xf32> to vector<4x16x128xf32>
    %59 = arith.truncf %58 : vector<4x16x128xf32> to vector<4x16x128xbf16>
    %c0_58 = arith.constant 0 : index
    %c0_59 = arith.constant 0 : index
    %c0_60 = arith.constant 0 : index
    %60 = vector.load %arg6[%c0_58, %c0_59, %c0_60] : memref<4x16x128xbf16, #tpu.memory_space<vmem>>, vector<4x16x128xbf16>
    tpu.vector_store %arg6[%c0_58, %c0_59, %c0_60], %59 {strides = array<i32>} : memref<4x16x128xbf16, #tpu.memory_space<vmem>>, vector<4x16x128xbf16>,
    return
  }
  func.func @transform_0(%arg0: i32) -> (i32, i32, i32) {
    %c0_i32 = arith.constant 0 : i32
    %c0_i32_0 = arith.constant 0 : i32
    %c0_i32_1 = arith.constant 0 : i32
    return %arg0, %c0_i32, %c0_i32_0 : i32, i32, i32
  }
  func.func @transform_1(%arg0: i32) -> (i32, i32, i32) {
    %c0_i32 = arith.constant 0 : i32
    %c0_i32_0 = arith.constant 0 : i32
    %c0_i32_1 = arith.constant 0 : i32
    %c0_i32_2 = arith.constant 0 : i32
    return %c0_i32, %c0_i32_0, %c0_i32_1 : i32, i32, i32
  }
  func.func @transform_2(%arg0: i32) -> (i32, i32) {
    %c0_i32 = arith.constant 0 : i32
    %c0_i32_0 = arith.constant 0 : i32
    %c0_i32_1 = arith.constant 0 : i32
    return %c0_i32, %c0_i32_0 : i32, i32
  }
  func.func @transform_3(%arg0: i32) -> (i32, i32, i32) {
    %c0_i32 = arith.constant 0 : i32
    %c0_i32_0 = arith.constant 0 : i32
    %c0_i32_1 = arith.constant 0 : i32
    %c0_i32_2 = arith.constant 0 : i32
    return %c0_i32, %c0_i32_0, %c0_i32_1 : i32, i32, i32
  }
  func.func @transform_4(%arg0: i32) -> (i32, i32) {
    %c0_i32 = arith.constant 0 : i32
    %c0_i32_0 = arith.constant 0 : i32
    %c0_i32_1 = arith.constant 0 : i32
    return %c0_i32, %c0_i32_0 : i32, i32
  }
  func.func @transform_5(%arg0: i32) -> (i32, i32, i32) {
    %c0_i32 = arith.constant 0 : i32
    %c0_i32_0 = arith.constant 0 : i32
    %c0_i32_1 = arith.constant 0 : i32
    return %arg0, %c0_i32, %c0_i32_0 : i32, i32, i32
  }
}

</mosaic_0001>

<llo_original>
// kernel: tile.13
$region0: #{tile.13}
  #allocation0 [shape = 's32[1]{0}', space=sflag, size = 0x4, scoped, tag = 'scoped memory for tile.13']
  %s0 = inlined_call_operand.vmem [shape: f32[8], index: 0, kind: input, shape index: {}]
  %s1 = inlined_call_operand.vmem [shape: f32[16,8], index: 1, kind: output, shape index: {}]
  // Predicated region
  $region2: #{tile.13} parent=0 // pred_check
    _
  $region3: #{tile.13} parent=0 // pred_check_branch
    %3 = sbr.rel (0) target = $region5
  $region4: #{tile.13} parent=0 // pred_region
    _
  $region5: #{tile.13} parent=0 // pred_fallthru
    _
  %v4 = vld [vmem:[%s0] ss:$0 sm:$0xff]
  %5 = vst [vmem:[%s1] sm:$0xff] %v4
  %s6 = scalar_lea.vmem %s1, 8
  %7 = vst [vmem:[%s6] sm:$0xff] %v4

// kernel: tile.14
$region0: #{tile.14}
  %s0 = inlined_call_operand.vmem [shape: f32[16,8], index: 0, kind: input, shape index: {}]
  %s1 = inlined_call_operand.vmem [shape: f32[1,128], index: 1, kind: output, shape index: {}]
  $region1: #{tile.14} parent=0
    #allocation0 [shape = 'u8[4096]{0}', space=vmem, size = 0x1000, scoped, tag = 'scoped mem for output reshape']
    %v2 = vld [vmem:[%s0] sm:$0x1]
    %vm3 = vcmask 64512
    %4 = vst.msk [vmem:[#allocation0] sm:$0x1] %vm3, %v2
    %s5 = scalar_lea.vmem %s0, 15
    %v6 = vld [vmem:[%s5] sm:$0x1]
    %7 = vrot.lane.b32.xlu0 %v6, 120
    %v8 = vpop.permute.xlu0 %7
    %vm9 = vcmask 1048512
    %10 = vst.msk [vmem:[#allocation0] sm:$0x1] %vm9, %v8
    %s11 = scalar_lea.vmem %s0, 14
    %v12 = vld [vmem:[%s11] sm:$0x1]
    %13 = vrot.lane.b32.xlu0 %v12, 112
    %v14 = vpop.permute.xlu0 %13
    %vm15 = vcmask 982912
    %16 = vst.msk [vmem:[#allocation0] sm:$0x1] %vm15, %v14
    %s17 = scalar_lea.vmem %s0, 13
    %v18 = vld [vmem:[%s17] sm:$0x1]
    %19 = vrot.lane.b32.xlu0 %v18, 104
    %v20 = vpop.permute.xlu0 %19
    %vm21 = vcmask 917312
    %22 = vst.msk [vmem:[#allocation0] sm:$0x1] %vm21, %v20
    %s23 = scalar_lea.vmem %s0, 12
    %v24 = vld [vmem:[%s23] sm:$0x1]
    %25 = vrot.lane.b32.xlu0 %v24, 96
    %v26 = vpop.permute.xlu0 %25
    %vm27 = vcmask 851712
    %28 = vst.msk [vmem:[#allocation0] sm:$0x1] %vm27, %v26
    %s29 = scalar_lea.vmem %s0, 11
    %v30 = vld [vmem:[%s29] sm:$0x1]
    %31 = vrot.lane.b32.xlu0 %v30, 88
    %v32 = vpop.permute.xlu0 %31
    %vm33 = vcmask 786112
    %34 = vst.msk [vmem:[#allocation0] sm:$0x1] %vm33, %v32
    %s35 = scalar_lea.vmem %s0, 10
    %v36 = vld [vmem:[%s35] sm:$0x1]
    %37 = vrot.lane.b32.xlu0 %v36, 80
    %v38 = vpop.permute.xlu0 %37
    %vm39 = vcmask 720512
    %40 = vst.msk [vmem:[#allocation0] sm:$0x1] %vm39, %v38
    %s41 = scalar_lea.vmem %s0, 9
    %v42 = vld [vmem:[%s41] sm:$0x1]
    %43 = vrot.lane.b32.xlu0 %v42, 72
    %v44 = vpop.permute.xlu0 %43
    %vm45 = vcmask 654912
    %46 = vst.msk [vmem:[#allocation0] sm:$0x1] %vm45, %v44
    %s47 = scalar_lea.vmem %s0, 8
    %v48 = vld [vmem:[%s47] sm:$0x1]
    %49 = vrot.lane.b32.xlu0 %v48, 64
    %v50 = vpop.permute.xlu0 %49
    %vm51 = vcmask 589312
    %52 = vst.msk [vmem:[#allocation0] sm:$0x1] %vm51, %v50
    %s53 = scalar_lea.vmem %s0, 7
    %v54 = vld [vmem:[%s53] sm:$0x1]
    %55 = vrot.lane.b32.xlu0 %v54, 56
    %v56 = vpop.permute.xlu0 %55
    %vm57 = vcmask 523712
    %58 = vst.msk [vmem:[#allocation0] sm:$0x1] %vm57, %v56
    %s59 = scalar_lea.vmem %s0, 6
    %v60 = vld [vmem:[%s59] sm:$0x1]
    %61 = vrot.lane.b32.xlu0 %v60, 48
    %v62 = vpop.permute.xlu0 %61
    %vm63 = vcmask 458112
    %64 = vst.msk [vmem:[#allocation0] sm:$0x1] %vm63, %v62
    %s65 = scalar_lea.vmem %s0, 5
    %v66 = vld [vmem:[%s65] sm:$0x1]
    %67 = vrot.lane.b32.xlu0 %v66, 40
    %v68 = vpop.permute.xlu0 %67
    %vm69 = vcmask 392512
    %70 = vst.msk [vmem:[#allocation0] sm:$0x1] %vm69, %v68
    %s71 = scalar_lea.vmem %s0, 4
    %v72 = vld [vmem:[%s71] sm:$0x1]
    %73 = vrot.lane.b32.xlu0 %v72, 32
    %v74 = vpop.permute.xlu0 %73
    %vm75 = vcmask 326912
    %76 = vst.msk [vmem:[#allocation0] sm:$0x1] %vm75, %v74
    %s77 = scalar_lea.vmem %s0, 3
    %v78 = vld [vmem:[%s77] sm:$0x1]
    %79 = vrot.lane.b32.xlu0 %v78, 24
    %v80 = vpop.permute.xlu0 %79
    %vm81 = vcmask 261312
    %82 = vst.msk [vmem:[#allocation0] sm:$0x1] %vm81, %v80
    %s83 = scalar_lea.vmem %s0, 2
    %v84 = vld [vmem:[%s83] sm:$0x1]
    %85 = vrot.lane.b32.xlu0 %v84, 16
    %v86 = vpop.permute.xlu0 %85
    %vm87 = vcmask 195712
    %88 = vst.msk [vmem:[#allocation0] sm:$0x1] %vm87, %v86
    %s89 = scalar_lea.vmem %s0, 1
    %v90 = vld [vmem:[%s89] sm:$0x1]
    %91 = vrot.lane.b32.xlu0 %v90, 8
    %v92 = vpop.permute.xlu0 %91
    %vm93 = vcmask 130112
    %94 = vst.msk [vmem:[#allocation0] sm:$0x1] %vm93, %v92
    %s96 = ssub.s32 2, 1
    %v97 = vld [vmem:[#allocation0] sm:%s96]
    %s99 = ssub.s32 2, 1
    %100 = vst [vmem:[%s1] sm:%s99] %v97

// kernel: basic_block_pallas.1
$region0: #{basic_block_pallas.1}
  #allocation0 [shape = 'u32[]', space=smem, size = 0x4, offset = 0x4, fixed_abs, tag = 'smem constant byte address 0x4 - core index']
  #allocation1 [shape = 'u32[72,128]{1,0:T(1,128)}', space=vmem, size = 0x9000, scoped, tag = 'internal scratch']
  #allocation2 [shape = 'bf16[4,18,128]{2,1,0:T(8,128)(2,1)}', space=vmem, size = 0x6000, scoped, tag = 'scratch operand']
  %s0 = inlined_call_operand.vmem [shape: bf16[8,18,128], index: 0, kind: input, shape index: {}]
  %s1 = inlined_call_operand.vmem [shape: bf16[3,128,128], index: 1, kind: input, shape index: {}]
  %s2 = inlined_call_operand.vmem [shape: f32[1,128], index: 2, kind: input, shape index: {}]
  %s3 = inlined_call_operand.vmem [shape: bf16[3,128,128], index: 3, kind: input, shape index: {}]
  %s4 = inlined_call_operand.vmem [shape: f32[1,128], index: 4, kind: input, shape index: {}]
  %s5 = inlined_call_operand.vmem [shape: bf16[8,16,128], index: 5, kind: output, shape index: {}]
  %s6 = sld [smem:[#allocation0]]
  $region53: #{basic_block_pallas.1} parent=0
    _
  %s8 = ssub.s32 1, %s6
  %s9 = scalar_select 0, %s8, %s6
  loop: start=0, step=1, limit=4
  $region2: #{basic_block_pallas.1} parent=0 // loop_pre_header
    _
  $region3: #{basic_block_pallas.1} parent=0 // loop_header
    %s11 = sphi 0, %s15
    %p12 = scmp.ge.s32.totalorder %s11, 4
    %s21 = sphi 0, %s23
    %s24 = sphi 0, %s21
    %s25 = sphi 0, %s24
    %s41 = sphi 0, %s25
    %s45 = sphi 0, %s45
    %s47 = sphi 0, %s45
    %s48 = sphi 0, %s47
    %s62 = sphi 0, %s48
    %s66 = sphi 0, %s66
    %s68 = sphi 0, %s66
    %s69 = sphi 0, %s68
    %s83 = sphi 0, %s69
    %s87 = sphi 0, %s87
    %s89 = sphi 0, %s87
    %s90 = sphi 0, %s89
    %s104 = sphi 0, %s90
    %s108 = sphi 0, %s108
    %s110 = sphi 0, %s108
    %s111 = sphi 0, %s110
    %s125 = sphi 0, %s111
    %s131 = sphi 0, %s133
    %s134 = sphi 0, %s131
    %s135 = sphi 0, %s134
    %s151 = sphi 0, %s135
  $region4: #{basic_block_pallas.1} parent=0 // loop_header_branch
    %14 = sbr.rel (%p12) target = $region8
  $region5: #{basic_block_pallas.1} parent=0 // loop_body
    %s16 = ssub.s32 %s11, 1
    %s17 = ssub.s32 %s11, 2
    %s18 = sadd.s32 %s11, 1
    %s19 = ssub.s32 %s11, %s18
    %p20 = scmp.eq.s32.totalorder %s19, 0
    %s22 = sadd.s32 %s21, 1
    %s23 = scalar_select %p20, %s21, %s22
    %p26 = pneg %p20
    %p27 = scmp.eq.s32.totalorder %s11, 1
    %p28 = por %p26, %p27
    %p29 = scmp.ne.s32.totalorder %s21, %s24
    %p30 = scmp.eq.s32.totalorder %s11, 0
    %p31 = por %p29, %p30
    %p32 = scmp.ne.s32.totalorder %s21, %s24
    %p33 = scmp.eq.s32.totalorder %s16, 1
    %p34 = por %p32, %p33
    %p35 = scmp.ne.s32.totalorder %s24, %s25
    %p36 = scmp.eq.s32.totalorder %s16, 0
    %p37 = por %p35, %p36
    %p38 = scmp.ne.s32.totalorder %s24, %s25
    %p39 = scmp.eq.s32.totalorder %s17, 1
    %p40 = por %p38, %p39
    %p42 = scmp.ne.s32.totalorder %s25, %s41
    %p43 = scmp.eq.s32.totalorder %s17, 0
    %p44 = por %p42, %p43
    %s46 = sadd.s32 %s45, 1
    %p49 = scmp.eq.s32.totalorder %s11, 1
    %p50 = scmp.ne.s32.totalorder %s45, %s47
    %p51 = scmp.eq.s32.totalorder %s11, 0
    %p52 = por %p50, %p51
    %p53 = scmp.ne.s32.totalorder %s45, %s47
    %p54 = scmp.eq.s32.totalorder %s16, 1
    %p55 = por %p53, %p54
    %p56 = scmp.ne.s32.totalorder %s47, %s48
    %p57 = scmp.eq.s32.totalorder %s16, 0
    %p58 = por %p56, %p57
    %p59 = scmp.ne.s32.totalorder %s47, %s48
    %p60 = scmp.eq.s32.totalorder %s17, 1
    %p61 = por %p59, %p60
    %p63 = scmp.ne.s32.totalorder %s48, %s62
    %p64 = scmp.eq.s32.totalorder %s17, 0
    %p65 = por %p63, %p64
    %s67 = sadd.s32 %s66, 1
    %p70 = scmp.eq.s32.totalorder %s11, 1
    %p71 = scmp.ne.s32.totalorder %s66, %s68
    %p72 = scmp.eq.s32.totalorder %s11, 0
    %p73 = por %p71, %p72
    %p74 = scmp.ne.s32.totalorder %s66, %s68
    %p75 = scmp.eq.s32.totalorder %s16, 1
    %p76 = por %p74, %p75
    %p77 = scmp.ne.s32.totalorder %s68, %s69
    %p78 = scmp.eq.s32.totalorder %s16, 0
    %p79 = por %p77, %p78
    %p80 = scmp.ne.s32.totalorder %s68, %s69
    %p81 = scmp.eq.s32.totalorder %s17, 1
    %p82 = por %p80, %p81
    %p84 = scmp.ne.s32.totalorder %s69, %s83
    %p85 = scmp.eq.s32.totalorder %s17, 0
    %p86 = por %p84, %p85
    %s88 = sadd.s32 %s87, 1
    %p91 = scmp.eq.s32.totalorder %s11, 1
    %p92 = scmp.ne.s32.totalorder %s87, %s89
    %p93 = scmp.eq.s32.totalorder %s11, 0
    %p94 = por %p92, %p93
    %p95 = scmp.ne.s32.totalorder %s87, %s89
    %p96 = scmp.eq.s32.totalorder %s16, 1
    %p97 = por %p95, %p96
    %p98 = scmp.ne.s32.totalorder %s89, %s90
    %p99 = scmp.eq.s32.totalorder %s16, 0
    %p100 = por %p98, %p99
    %p101 = scmp.ne.s32.totalorder %s89, %s90
    %p102 = scmp.eq.s32.totalorder %s17, 1
    %p103 = por %p101, %p102
    %p105 = scmp.ne.s32.totalorder %s90, %s104
    %p106 = scmp.eq.s32.totalorder %s17, 0
    %p107 = por %p105, %p106
    %s109 = sadd.s32 %s108, 1
    %p112 = scmp.eq.s32.totalorder %s11, 1
    %p113 = scmp.ne.s32.totalorder %s108, %s110
    %p114 = scmp.eq.s32.totalorder %s11, 0
    %p115 = por %p113, %p114
    %p116 = scmp.ne.s32.totalorder %s108, %s110
    %p117 = scmp.eq.s32.totalorder %s16, 1
    %p118 = por %p116, %p117
    %p119 = scmp.ne.s32.totalorder %s110, %s111
    %p120 = scmp.eq.s32.totalorder %s16, 0
    %p121 = por %p119, %p120
    %p122 = scmp.ne.s32.totalorder %s110, %s111
    %p123 = scmp.eq.s32.totalorder %s17, 1
    %p124 = por %p122, %p123
    %p126 = scmp.ne.s32.totalorder %s111, %s125
    %p127 = scmp.eq.s32.totalorder %s17, 0
    %p128 = por %p126, %p127
    %s129 = ssub.s32 %s11, %s18
    %p130 = scmp.eq.s32.totalorder %s129, 0
    %s132 = sadd.s32 %s131, 1
    %s133 = scalar_select %p130, %s131, %s132
    %p136 = pneg %p130
    %p137 = scmp.eq.s32.totalorder %s11, 1
    %p138 = por %p136, %p137
    %p139 = scmp.ne.s32.totalorder %s131, %s134
    %p140 = scmp.eq.s32.totalorder %s11, 0
    %p141 = por %p139, %p140
    %p142 = scmp.ne.s32.totalorder %s131, %s134
    %p143 = scmp.eq.s32.totalorder %s16, 1
    %p144 = por %p142, %p143
    %p145 = scmp.ne.s32.totalorder %s134, %s135
    %p146 = scmp.eq.s32.totalorder %s16, 0
    %p147 = por %p145, %p146
    %p148 = scmp.ne.s32.totalorder %s134, %s135
    %p149 = scmp.eq.s32.totalorder %s17, 1
    %p150 = por %p148, %p149
    %p152 = scmp.ne.s32.totalorder %s135, %s151
    %p153 = scmp.eq.s32.totalorder %s17, 0
    %p154 = por %p152, %p153
    %p155 = scmp.le.s32.totalorder 1, %s11
    %p156 = scmp.lt.s32.totalorder %s11, 3
    %p157 = pnand %p155, %p156
    %p158 = pneg %p157
    // Predicated region
    $region9: #{basic_block_pallas.1} parent=5 // pred_check
      _
    $region10: #{basic_block_pallas.1} parent=5 // pred_check_branch
      %160 = sbr.rel (%p157) target = $region12
    $region11: #{basic_block_pallas.1} parent=5 // pred_region
      %s161 = ssub.s32 %s11, 1
      // Predicated region
      $region13: #{basic_block_pallas.1} parent=11 // pred_check
        %p162 = pneg %p58
      $region14: #{basic_block_pallas.1} parent=11 // pred_check_branch
        %164 = sbr.rel (%p162) target = $region16
      $region15: #{basic_block_pallas.1} parent=11 // pred_region
        _
      $region16: #{basic_block_pallas.1} parent=11 // pred_fallthru
        _
      // Predicated region
      $region17: #{basic_block_pallas.1} parent=11 // pred_check
        %p165 = pneg %p79
      $region18: #{basic_block_pallas.1} parent=11 // pred_check_branch
        %167 = sbr.rel (%p165) target = $region20
      $region19: #{basic_block_pallas.1} parent=11 // pred_region
        _
      $region20: #{basic_block_pallas.1} parent=11 // pred_fallthru
        _
      // Predicated region
      $region21: #{basic_block_pallas.1} parent=11 // pred_check
        %p168 = pneg %p100
      $region22: #{basic_block_pallas.1} parent=11 // pred_check_branch
        %170 = sbr.rel (%p168) target = $region24
      $region23: #{basic_block_pallas.1} parent=11 // pred_region
        _
      $region24: #{basic_block_pallas.1} parent=11 // pred_fallthru
        _
      // Predicated region
      $region25: #{basic_block_pallas.1} parent=11 // pred_check
        %p171 = pneg %p121
      $region26: #{basic_block_pallas.1} parent=11 // pred_check_branch
        %173 = sbr.rel (%p171) target = $region28
      $region27: #{basic_block_pallas.1} parent=11 // pred_region
        _
      $region28: #{basic_block_pallas.1} parent=11 // pred_fallthru
        _
    $region12: #{basic_block_pallas.1} parent=5 // pred_fallthru
      _
    %p174 = scmp.lt.s32.totalorder %s11, 2
    // Predicated region
    $region29: #{basic_block_pallas.1} parent=5 // pred_check
      %p175 = pneg %p174
    $region30: #{basic_block_pallas.1} parent=5 // pred_check_branch
      %177 = sbr.rel (%p175) target = $region32
    $region31: #{basic_block_pallas.1} parent=5 // pred_region
      // Predicated region
      $region33: #{basic_block_pallas.1} parent=31 // pred_check
        %p178 = pneg %p31
      $region34: #{basic_block_pallas.1} parent=31 // pred_check_branch
        %180 = sbr.rel (%p178) target = $region36
      $region35: #{basic_block_pallas.1} parent=31 // pred_region
        %s181 = smul.u32 4, %s11
        %p182 = scmp.lt.s32.totalorder %s181, 7
        %s183 = scalar_select %p182, %s181, 7
        %s184 = smul.addr %s183, 3
        %s185 = smul.addr %s184, 4
        %s186 = scalar_lea.vmem %s0, %s185
        %s187 = smul.u32 4, %s11
      $region36: #{basic_block_pallas.1} parent=31 // pred_fallthru
        _
    $region32: #{basic_block_pallas.1} parent=5 // pred_fallthru
      _
    %p188 = scmp.le.s32.totalorder 1, %s11
    %p189 = scmp.lt.s32.totalorder %s11, 3
    %p190 = pnand %p188, %p189
    %p191 = pneg %p190
    // Predicated region
    $region37: #{basic_block_pallas.1} parent=5 // pred_check
      _
    $region38: #{basic_block_pallas.1} parent=5 // pred_check_branch
      %193 = sbr.rel (%p190) target = $region40
    $region39: #{basic_block_pallas.1} parent=5 // pred_region
      %s194 = ssub.s32 %s11, 1
      %s195 = smul.u32 4, %s16
      %p196 = scmp.lt.s32.totalorder %s195, 7
      %s197 = scalar_select %p196, %s195, 7
      %s198 = smul.addr %s197, 3
      %s199 = smul.addr %s198, 4
      %s200 = scalar_lea.vmem %s0, %s199
      %p201 = pneg %p37
      %p202 = pneg %p34
      %p203 = pneg %p58
      %p204 = pneg %p55
      %p205 = pneg %p79
      %p206 = pneg %p76
      %p207 = pneg %p100
      %p208 = pneg %p97
      %p209 = pneg %p121
      %p210 = pneg %p118
      %p211 = pneg %p147
      %p212 = pneg %p144
      %s213 = smul.u32 4, %s16
      %p214 = scmp.lt.s32.totalorder %s213, 7
      %s215 = scalar_select %p214, %s213, 7
      %s216 = smul.addr %s215, 2
      %s217 = smul.addr %s216, 4
      %s218 = scalar_lea.vmem %s5, %s217
      %s219 = smul.u32 4, %s16
      %p220 = scmp.lt.s32.totalorder %s219, 7
      %s221 = scalar_select %p220, %s219, 7
      %s222 = smul.addr %s221, 3
      %s223 = smul.addr %s222, 4
      %s224 = scalar_lea.vmem %s0, %s223
      %s225 = smul.u32 4, %s16
      %s226 = smul.u32 4, %s16
      %p227 = scmp.lt.s32.totalorder %s226, 7
      %s228 = scalar_select %p227, %s226, 7
      %s229 = smul.addr %s228, 2
      %s230 = smul.addr %s229, 4
      %s231 = scalar_lea.vmem %s5, %s230
      %s232 = smul.u32 4, %s16
      %v234 = vld [vmem:[%s224] sm:$0xf]
      %v235 = vld [vmem:[%s224 + $0x4] sm:$0xf]
      %v236 = vld [vmem:[%s224 + $0xc] sm:$0xf]
      %v237 = vld [vmem:[%s224 + $0x10] sm:$0xf]
      %v238 = vld [vmem:[%s224 + $0x18] sm:$0xf]
      %v239 = vld [vmem:[%s224 + $0x1c] sm:$0xf]
      %v240 = vld [vmem:[%s224 + $0x24] sm:$0xf]
      %v241 = vld [vmem:[%s224 + $0x28] sm:$0xf]
      %v242 = vld [vmem:[%s1] sm:$0xf]
      %v243 = vld [vmem:[%s1 + $0x4] sm:$0xf]
      %v244 = vld [vmem:[%s1 + $0x8] sm:$0xf]
      %v245 = vld [vmem:[%s1 + $0xc] sm:$0xf]
      %v246 = vld [vmem:[%s1 + $0x10] sm:$0xf]
      %v247 = vld [vmem:[%s1 + $0x14] sm:$0xf]
      %v248 = vld [vmem:[%s1 + $0x18] sm:$0xf]
      %v249 = vld [vmem:[%s1 + $0x1c] sm:$0xf]
      %v250 = vld [vmem:[%s1 + $0x20] sm:$0xf]
      %v251 = vld [vmem:[%s1 + $0x24] sm:$0xf]
      %v252 = vld [vmem:[%s1 + $0x28] sm:$0xf]
      %v253 = vld [vmem:[%s1 + $0x2c] sm:$0xf]
      %v254 = vld [vmem:[%s1 + $0x30] sm:$0xf]
      %v255 = vld [vmem:[%s1 + $0x34] sm:$0xf]
      %v256 = vld [vmem:[%s1 + $0x38] sm:$0xf]
      %v257 = vld [vmem:[%s1 + $0x3c] sm:$0xf]
      %v258 = vld [vmem:[%s224 + $0x8] sm:$0x1]
      %v259 = vld [vmem:[%s224 + $0x14] sm:$0x1]
      %v260 = vld [vmem:[%s224 + $0x20] sm:$0x1]
      %v261 = vld [vmem:[%s224 + $0x2c] sm:$0x1]
      %vm262 = vsmask.f32 3328
      %vm263 = vsmask.f32 7440
      %vm264 = vmor %vm262, %vm263
      %v266 = vshrl.u32 %v234, 16
      %v268 = vrot.slane %v266, 4
      %v269 = vshll.u32 %v234, 16
      %v271 = vrot.slane %v269, 5
      %v272 = vor.u32 %v268, %v271
      %v273 = vrot.slane %v272, 4
      %v275 = vshll.u32 %v235, 16
      %v277 = vrot.slane %v275, 5
      %v278 = vsel %vm264, %v273, %v277
      %v279 = vshrl.u32 %v235, 16
      %v281 = vrot.slane %v279, 4
      %v282 = vor.u32 %v281, %v277
      %v283 = vrot.slane %v282, 4
      %v285 = vshll.u32 %v258, 16
      %v287 = vrot.slane %v285, 5
      %v288 = vsel %vm264, %v283, %v287
      %v290 = vshrl.u32 %v236, 16
      %v292 = vrot.slane %v290, 4
      %v293 = vshll.u32 %v236, 16
      %v295 = vrot.slane %v293, 5
      %v296 = vor.u32 %v292, %v295
      %v297 = vrot.slane %v296, 4
      %v299 = vshll.u32 %v237, 16
      %v301 = vrot.slane %v299, 5
      %v302 = vsel %vm264, %v297, %v301
      %v303 = vshrl.u32 %v237, 16
      %v305 = vrot.slane %v303, 4
      %v306 = vor.u32 %v305, %v301
      %v307 = vrot.slane %v306, 4
      %v309 = vshll.u32 %v259, 16
      %v311 = vrot.slane %v309, 5
      %v312 = vsel %vm264, %v307, %v311
      %v314 = vshrl.u32 %v238, 16
      %v316 = vrot.slane %v314, 4
      %v317 = vshll.u32 %v238, 16
      %v319 = vrot.slane %v317, 5
      %v320 = vor.u32 %v316, %v319
      %v321 = vrot.slane %v320, 4
      %v323 = vshll.u32 %v239, 16
      %v325 = vrot.slane %v323, 5
      %v326 = vsel %vm264, %v321, %v325
      %v327 = vshrl.u32 %v239, 16
      %v329 = vrot.slane %v327, 4
      %v330 = vor.u32 %v329, %v325
      %v331 = vrot.slane %v330, 4
      %v333 = vshll.u32 %v260, 16
      %v335 = vrot.slane %v333, 5
      %v336 = vsel %vm264, %v331, %v335
      %v338 = vshrl.u32 %v240, 16
      %v340 = vrot.slane %v338, 4
      %v341 = vshll.u32 %v240, 16
      %v343 = vrot.slane %v341, 5
      %v344 = vor.u32 %v340, %v343
      %v345 = vrot.slane %v344, 4
      %v347 = vshll.u32 %v241, 16
      %v349 = vrot.slane %v347, 5
      %v350 = vsel %vm264, %v345, %v349
      %v351 = vshrl.u32 %v241, 16
      %v353 = vrot.slane %v351, 4
      %v354 = vor.u32 %v353, %v349
      %v355 = vrot.slane %v354, 4
      %v357 = vshll.u32 %v261, 16
      %v359 = vrot.slane %v357, 5
      %v360 = vsel %vm264, %v355, %v359
      %s361 = scalar_lea.vmem %s1, 64
      %v362 = vld [vmem:[%s361] sm:$0xf]
      %v363 = vld [vmem:[%s361 + $0x4] sm:$0xf]
      %v364 = vld [vmem:[%s361 + $0x8] sm:$0xf]
      %v365 = vld [vmem:[%s361 + $0xc] sm:$0xf]
      %v366 = vld [vmem:[%s361 + $0x10] sm:$0xf]
      %v367 = vld [vmem:[%s361 + $0x14] sm:$0xf]
      %v368 = vld [vmem:[%s361 + $0x18] sm:$0xf]
      %v369 = vld [vmem:[%s361 + $0x1c] sm:$0xf]
      %v370 = vld [vmem:[%s361 + $0x20] sm:$0xf]
      %v371 = vld [vmem:[%s361 + $0x24] sm:$0xf]
      %v372 = vld [vmem:[%s361 + $0x28] sm:$0xf]
      %v373 = vld [vmem:[%s361 + $0x2c] sm:$0xf]
      %v374 = vld [vmem:[%s361 + $0x30] sm:$0xf]
      %v375 = vld [vmem:[%s361 + $0x34] sm:$0xf]
      %v376 = vld [vmem:[%s361 + $0x38] sm:$0xf]
      %v377 = vld [vmem:[%s361 + $0x3c] sm:$0xf]
      %v378 = vunpack.c.l.b16 %v278
      %v379 = vunpack.c.l.b16 %v288
      %v380 = vunpack.c.l.b16 %v302
      %v381 = vunpack.c.l.b16 %v312
      %v382 = vunpack.c.l.b16 %v326
      %v383 = vunpack.c.l.b16 %v336
      %v384 = vunpack.c.l.b16 %v350
      %v385 = vunpack.c.l.b16 %v360
      %v386 = vpack.c.b16 %v379, %v378
      %v387 = vpack.c.b16 %v381, %v380
      %v388 = vpack.c.b16 %v383, %v382
      %v389 = vpack.c.b16 %v385, %v384
      %v410 = vunpack.c.l.b16 %v362
      %v411 = vunpack.c.l.b16 %v363
      %v412 = vunpack.c.l.b16 %v364
      %v413 = vunpack.c.l.b16 %v365
      %v414 = vunpack.c.l.b16 %v366
      %v415 = vunpack.c.l.b16 %v367
      %v416 = vunpack.c.l.b16 %v368
      %v417 = vunpack.c.l.b16 %v369
      %v418 = vunpack.c.l.b16 %v370
      %v419 = vunpack.c.l.b16 %v371
      %v420 = vunpack.c.l.b16 %v372
      %v421 = vunpack.c.l.b16 %v373
      %v422 = vunpack.c.l.b16 %v374
      %v423 = vunpack.c.l.b16 %v375
      %v424 = vunpack.c.l.b16 %v376
      %v425 = vunpack.c.l.b16 %v377
      %v426 = vpack.c.b16 %v411, %v410
      %v427 = vpack.c.b16 %v413, %v412
      %v428 = vpack.c.b16 %v415, %v414
      %v429 = vpack.c.b16 %v417, %v416
      %v430 = vpack.c.b16 %v419, %v418
      %v431 = vpack.c.b16 %v421, %v420
      %v432 = vpack.c.b16 %v423, %v422
      %v433 = vpack.c.b16 %v425, %v424
      %442 = vmatpush.bf16.msra.mxu0 %v433
      %443 = vmatpush.bf16.msra.mxu0 %v432
      %444 = vmatpush.bf16.msra.mxu0 %v431
      %445 = vmatpush.bf16.msra.mxu0 %v430
      %446 = vmatpush.bf16.msra.mxu0 %v429
      %447 = vmatpush.bf16.msra.mxu0 %v428
      %448 = vmatpush.bf16.msra.mxu0 %v427
      %449 = vmatpush.bf16.msra.mxu0 %v426
      %450 = vmatmul.bf16.gmra.mxu0 %v386
      %v451 = vpop.f32.mrf.mxu0
      %v452 = vadd.f32 0.0, %v451
      %v453 = vpop.f32.mrf.mxu0
      %v454 = vadd.f32 0.0, %v453
      %455 = vmatmul.bf16.gmra.mxu0 %v387
      %v456 = vpop.f32.mrf.mxu0
      %v457 = vadd.f32 0.0, %v456
      %v458 = vpop.f32.mrf.mxu0
      %v459 = vadd.f32 0.0, %v458
      %460 = vmatmul.bf16.gmra.mxu0 %v388
      %v461 = vpop.f32.mrf.mxu0
      %v462 = vadd.f32 0.0, %v461
      %v463 = vpop.f32.mrf.mxu0
      %v464 = vadd.f32 0.0, %v463
      %465 = vmatmul.bf16.gmra.mxu0 %v389
      %v466 = vpop.f32.mrf.mxu0
      %v467 = vadd.f32 0.0, %v466
      %v468 = vpop.f32.mrf.mxu0
      %v469 = vadd.f32 0.0, %v468
      %470 = vdwg.mxu0
      %v479 = vunpack.c.l.b16 %v234
      %v480 = vunpack.c.l.b16 %v235
      %v481 = vunpack.c.l.b16 %v236
      %v482 = vunpack.c.l.b16 %v237
      %v483 = vunpack.c.l.b16 %v238
      %v484 = vunpack.c.l.b16 %v239
      %v485 = vunpack.c.l.b16 %v240
      %v486 = vunpack.c.l.b16 %v241
      %v487 = vpack.c.b16 %v480, %v479
      %v488 = vpack.c.b16 %v482, %v481
      %v489 = vpack.c.b16 %v484, %v483
      %v490 = vpack.c.b16 %v486, %v485
      %v511 = vunpack.c.l.b16 %v242
      %v512 = vunpack.c.l.b16 %v243
      %v513 = vunpack.c.l.b16 %v244
      %v514 = vunpack.c.l.b16 %v245
      %v515 = vunpack.c.l.b16 %v246
      %v516 = vunpack.c.l.b16 %v247
      %v517 = vunpack.c.l.b16 %v248
      %v518 = vunpack.c.l.b16 %v249
      %v519 = vunpack.c.l.b16 %v250
      %v520 = vunpack.c.l.b16 %v251
      %v521 = vunpack.c.l.b16 %v252
      %v522 = vunpack.c.l.b16 %v253
      %v523 = vunpack.c.l.b16 %v254
      %v524 = vunpack.c.l.b16 %v255
      %v525 = vunpack.c.l.b16 %v256
      %v526 = vunpack.c.l.b16 %v257
      %v527 = vpack.c.b16 %v512, %v511
      %v528 = vpack.c.b16 %v514, %v513
      %v529 = vpack.c.b16 %v516, %v515
      %v530 = vpack.c.b16 %v518, %v517
      %v531 = vpack.c.b16 %v520, %v519
      %v532 = vpack.c.b16 %v522, %v521
      %v533 = vpack.c.b16 %v524, %v523
      %v534 = vpack.c.b16 %v526, %v525
      %543 = vmatpush.bf16.msra.mxu0 %v534
      %544 = vmatpush.bf16.msra.mxu0 %v533
      %545 = vmatpush.bf16.msra.mxu0 %v532
      %546 = vmatpush.bf16.msra.mxu0 %v531
      %547 = vmatpush.bf16.msra.mxu0 %v530
      %548 = vmatpush.bf16.msra.mxu0 %v529
      %549 = vmatpush.bf16.msra.mxu0 %v528
      %550 = vmatpush.bf16.msra.mxu0 %v527
      %551 = vmatmul.bf16.gmra.mxu0 %v487
      %v552 = vpop.f32.mrf.mxu0
      %v553 = vadd.f32 %v452, %v552
      %v554 = vpop.f32.mrf.mxu0
      %v555 = vadd.f32 %v454, %v554
      %556 = vmatmul.bf16.gmra.mxu0 %v488
      %v557 = vpop.f32.mrf.mxu0
      %v558 = vadd.f32 %v457, %v557
      %v559 = vpop.f32.mrf.mxu0
      %v560 = vadd.f32 %v459, %v559
      %561 = vmatmul.bf16.gmra.mxu0 %v489
      %v562 = vpop.f32.mrf.mxu0
      %v563 = vadd.f32 %v462, %v562
      %v564 = vpop.f32.mrf.mxu0
      %v565 = vadd.f32 %v464, %v564
      %566 = vmatmul.bf16.gmra.mxu0 %v490
      %v567 = vpop.f32.mrf.mxu0
      %v568 = vadd.f32 %v467, %v567
      %v569 = vpop.f32.mrf.mxu0
      %v570 = vadd.f32 %v469, %v569
      %571 = vdwg.mxu0
      %v572 = vld [vmem:[%s224] sm:$0xe]
      %v573 = vld [vmem:[%s224 + $0xc] sm:$0xe]
      %v574 = vld [vmem:[%s224 + $0x18] sm:$0xe]
      %v575 = vld [vmem:[%s224 + $0x24] sm:$0xe]
      %vm584 = vcmask 1042432
      %vm585 = vcmask 1046532
      %vm586 = vmor %vm584, %vm585
      %v587 = vrot.slane %v572, 5
      %v588 = vrot.slane %v587, 4
      %v589 = vrot.slane %v235, 5
      %v590 = vsel %vm586, %v588, %v589
      %v591 = vrot.slane %v589, 4
      %v592 = vrot.slane %v258, 5
      %v593 = vsel %vm586, %v591, %v592
      %v594 = vrot.slane %v573, 5
      %v595 = vrot.slane %v594, 4
      %v596 = vrot.slane %v237, 5
      %v597 = vsel %vm586, %v595, %v596
      %v598 = vrot.slane %v596, 4
      %v599 = vrot.slane %v259, 5
      %v600 = vsel %vm586, %v598, %v599
      %v601 = vrot.slane %v574, 5
      %v602 = vrot.slane %v601, 4
      %v603 = vrot.slane %v239, 5
      %v604 = vsel %vm586, %v602, %v603
      %v605 = vrot.slane %v603, 4
      %v606 = vrot.slane %v260, 5
      %v607 = vsel %vm586, %v605, %v606
      %v608 = vrot.slane %v575, 5
      %v609 = vrot.slane %v608, 4
      %v610 = vrot.slane %v241, 5
      %v611 = vsel %vm586, %v609, %v610
      %v612 = vrot.slane %v610, 4
      %v613 = vrot.slane %v261, 5
      %v614 = vsel %vm586, %v612, %v613
      %s615 = scalar_lea.vmem %s1, 128
      %v616 = vld [vmem:[%s615] sm:$0xf]
      %v617 = vld [vmem:[%s615 + $0x4] sm:$0xf]
      %v618 = vld [vmem:[%s615 + $0x8] sm:$0xf]
      %v619 = vld [vmem:[%s615 + $0xc] sm:$0xf]
      %v620 = vld [vmem:[%s615 + $0x10] sm:$0xf]
      %v621 = vld [vmem:[%s615 + $0x14] sm:$0xf]
      %v622 = vld [vmem:[%s615 + $0x18] sm:$0xf]
      %v623 = vld [vmem:[%s615 + $0x1c] sm:$0xf]
      %v624 = vld [vmem:[%s615 + $0x20] sm:$0xf]
      %v625 = vld [vmem:[%s615 + $0x24] sm:$0xf]
      %v626 = vld [vmem:[%s615 + $0x28] sm:$0xf]
      %v627 = vld [vmem:[%s615 + $0x2c] sm:$0xf]
      %v628 = vld [vmem:[%s615 + $0x30] sm:$0xf]
      %v629 = vld [vmem:[%s615 + $0x34] sm:$0xf]
      %v630 = vld [vmem:[%s615 + $0x38] sm:$0xf]
      %v631 = vld [vmem:[%s615 + $0x3c] sm:$0xf]
      %v632 = vunpack.c.l.b16 %v590
      %v633 = vunpack.c.l.b16 %v593
      %v634 = vunpack.c.l.b16 %v597
      %v635 = vunpack.c.l.b16 %v600
      %v636 = vunpack.c.l.b16 %v604
      %v637 = vunpack.c.l.b16 %v607
      %v638 = vunpack.c.l.b16 %v611
      %v639 = vunpack.c.l.b16 %v614
      %v640 = vpack.c.b16 %v633, %v632
      %v641 = vpack.c.b16 %v635, %v634
      %v642 = vpack.c.b16 %v637, %v636
      %v643 = vpack.c.b16 %v639, %v638
      %v664 = vunpack.c.l.b16 %v616
      %v665 = vunpack.c.l.b16 %v617
      %v666 = vunpack.c.l.b16 %v618
      %v667 = vunpack.c.l.b16 %v619
      %v668 = vunpack.c.l.b16 %v620
      %v669 = vunpack.c.l.b16 %v621
      %v670 = vunpack.c.l.b16 %v622
      %v671 = vunpack.c.l.b16 %v623
      %v672 = vunpack.c.l.b16 %v624
      %v673 = vunpack.c.l.b16 %v625
      %v674 = vunpack.c.l.b16 %v626
      %v675 = vunpack.c.l.b16 %v627
      %v676 = vunpack.c.l.b16 %v628
      %v677 = vunpack.c.l.b16 %v629
      %v678 = vunpack.c.l.b16 %v630
      %v679 = vunpack.c.l.b16 %v631
      %v680 = vpack.c.b16 %v665, %v664
      %v681 = vpack.c.b16 %v667, %v666
      %v682 = vpack.c.b16 %v669, %v668
      %v683 = vpack.c.b16 %v671, %v670
      %v684 = vpack.c.b16 %v673, %v672
      %v685 = vpack.c.b16 %v675, %v674
      %v686 = vpack.c.b16 %v677, %v676
      %v687 = vpack.c.b16 %v679, %v678
      %696 = vmatpush.bf16.msra.mxu0 %v687
      %697 = vmatpush.bf16.msra.mxu0 %v686
      %698 = vmatpush.bf16.msra.mxu0 %v685
      %699 = vmatpush.bf16.msra.mxu0 %v684
      %700 = vmatpush.bf16.msra.mxu0 %v683
      %701 = vmatpush.bf16.msra.mxu0 %v682
      %702 = vmatpush.bf16.msra.mxu0 %v681
      %703 = vmatpush.bf16.msra.mxu0 %v680
      %704 = vmatmul.bf16.gmra.mxu0 %v640
      %v705 = vpop.f32.mrf.mxu0
      %v706 = vadd.f32 0.0, %v705
      %v707 = vpop.f32.mrf.mxu0
      %v708 = vadd.f32 0.0, %v707
      %709 = vmatmul.bf16.gmra.mxu0 %v641
      %v710 = vpop.f32.mrf.mxu0
      %v711 = vadd.f32 0.0, %v710
      %v712 = vpop.f32.mrf.mxu0
      %v713 = vadd.f32 0.0, %v712
      %714 = vmatmul.bf16.gmra.mxu0 %v642
      %v715 = vpop.f32.mrf.mxu0
      %v716 = vadd.f32 0.0, %v715
      %v717 = vpop.f32.mrf.mxu0
      %v718 = vadd.f32 0.0, %v717
      %719 = vmatmul.bf16.gmra.mxu0 %v643
      %v720 = vpop.f32.mrf.mxu0
      %v721 = vadd.f32 0.0, %v720
      %v722 = vpop.f32.mrf.mxu0
      %v723 = vadd.f32 0.0, %v722
      %724 = vdwg.mxu0
      %v725 = vadd.f32 %v553, %v706
      %v726 = vadd.f32 %v555, %v708
      %v727 = vadd.f32 %v558, %v711
      %v728 = vadd.f32 %v560, %v713
      %v729 = vadd.f32 %v563, %v716
      %v730 = vadd.f32 %v565, %v718
      %v731 = vadd.f32 %v568, %v721
      %v732 = vadd.f32 %v570, %v723
      %v733 = vld [vmem:[%s2] sm:$0x1]
      %v735 = vperm.slane %v733, 0
      %v737 = vadd.f32 %v725, %v735
      %v738 = vadd.f32 %v726, %v735
      %v739 = vadd.f32 %v727, %v735
      %v740 = vadd.f32 %v728, %v735
      %v741 = vadd.f32 %v729, %v735
      %v742 = vadd.f32 %v730, %v735
      %v743 = vadd.f32 %v731, %v735
      %v744 = vadd.f32 %v732, %v735
      %v745 = vmax.f32 %v737, 0.0
      %v746 = vmax.f32 %v738, 0.0
      %v747 = vmax.f32 %v739, 0.0
      %v748 = vmax.f32 %v740, 0.0
      %v749 = vmax.f32 %v741, 0.0
      %v750 = vmax.f32 %v742, 0.0
      %v751 = vmax.f32 %v743, 0.0
      %v752 = vmax.f32 %v744, 0.0
      %vm753 = vcmask 1040384
      %vm754 = vsmask.f32 256
      %vm755 = vmand %vm753, %vm754
      %v756 = vld [vmem:[#allocation2] sm:$0x1]
      %v757 = vsel %vm755, 0, %v756
      %758 = vst [vmem:[#allocation2] sm:$0x1] %v757
      %v759 = vld [vmem:[#allocation2 + $0xc] sm:$0x1]
      %v760 = vsel %vm755, 0, %v759
      %761 = vst [vmem:[#allocation2 + $0xc] sm:$0x1] %v760
      %v762 = vld [vmem:[#allocation2 + $0x18] sm:$0x1]
      %v763 = vsel %vm755, 0, %v762
      %764 = vst [vmem:[#allocation2 + $0x18] sm:$0x1] %v763
      %v765 = vld [vmem:[#allocation2 + $0x24] sm:$0x1]
      %v766 = vsel %vm755, 0, %v765
      %767 = vst [vmem:[#allocation2 + $0x24] sm:$0x1] %v766
      %vm768 = vsmask.f32 7938
      %vm769 = vmand %vm753, %vm768
      %v770 = vld [vmem:[#allocation2 + $0x8] sm:$0x1]
      %v771 = vsel %vm769, 0, %v770
      %772 = vst [vmem:[#allocation2 + $0x8] sm:$0x1] %v771
      %v773 = vld [vmem:[#allocation2 + $0x14] sm:$0x1]
      %v774 = vsel %vm769, 0, %v773
      %775 = vst [vmem:[#allocation2 + $0x14] sm:$0x1] %v774
      %v776 = vld [vmem:[#allocation2 + $0x20] sm:$0x1]
      %v777 = vsel %vm769, 0, %v776
      %778 = vst [vmem:[#allocation2 + $0x20] sm:$0x1] %v777
      %v779 = vld [vmem:[#allocation2 + $0x2c] sm:$0x1]
      %v780 = vsel %vm769, 0, %v779
      %781 = vst [vmem:[#allocation2 + $0x2c] sm:$0x1] %v780
      %v782 = vpack.c.bf16 %v745, %v745
      %v783 = vpack.c.bf16 %v746, %v746
      %v784 = vpack.c.bf16 %v747, %v747
      %v785 = vpack.c.bf16 %v748, %v748
      %v786 = vpack.c.bf16 %v749, %v749
      %v787 = vpack.c.bf16 %v750, %v750
      %v788 = vpack.c.bf16 %v751, %v751
      %v789 = vpack.c.bf16 %v752, %v752
      %vm790 = vsmask.f32 4368
      %vm791 = vmor %vm754, %vm790
      %v793 = vshrl.u32 %v782, 16
      %v795 = vrot.slane %v793, 7
      %v796 = vshll.u32 %v782, 16
      %v798 = vor.u32 %v795, %v796
      %v799 = vrot.slane %v795, 4
      %v801 = vshrl.u32 %v783, 16
      %v803 = vrot.slane %v801, 7
      %v804 = vshll.u32 %v783, 16
      %v806 = vor.u32 %v803, %v804
      %v807 = vsel %vm791, %v799, %v806
      %v808 = vrot.slane %v803, 4
      %v810 = vshrl.u32 %v784, 16
      %v812 = vrot.slane %v810, 7
      %v813 = vshll.u32 %v784, 16
      %v815 = vor.u32 %v812, %v813
      %v816 = vrot.slane %v812, 4
      %v818 = vshrl.u32 %v785, 16
      %v820 = vrot.slane %v818, 7
      %v821 = vshll.u32 %v785, 16
      %v823 = vor.u32 %v820, %v821
      %v824 = vsel %vm791, %v816, %v823
      %v825 = vrot.slane %v820, 4
      %v827 = vshrl.u32 %v786, 16
      %v829 = vrot.slane %v827, 7
      %v830 = vshll.u32 %v786, 16
      %v832 = vor.u32 %v829, %v830
      %v833 = vrot.slane %v829, 4
      %v835 = vshrl.u32 %v787, 16
      %v837 = vrot.slane %v835, 7
      %v838 = vshll.u32 %v787, 16
      %v840 = vor.u32 %v837, %v838
      %v841 = vsel %vm791, %v833, %v840
      %v842 = vrot.slane %v837, 4
      %v844 = vshrl.u32 %v788, 16
      %v846 = vrot.slane %v844, 7
      %v847 = vshll.u32 %v788, 16
      %v849 = vor.u32 %v846, %v847
      %v850 = vrot.slane %v846, 4
      %v852 = vshrl.u32 %v789, 16
      %v854 = vrot.slane %v852, 7
      %v855 = vshll.u32 %v789, 16
      %v857 = vor.u32 %v854, %v855
      %v858 = vsel %vm791, %v850, %v857
      %v859 = vrot.slane %v854, 4
      %vm872 = vcmask 1043456
      %vm873 = vmand %vm872, %vm768
      %v874 = vld [vmem:[#allocation2] sm:$0xf]
      %v875 = vsel %vm873, %v798, %v874
      %876 = vst [vmem:[#allocation2] sm:$0xf] %v875
      %877 = vst [vmem:[#allocation2 + $0x4] sm:$0xf] %v807
      %v878 = vld [vmem:[#allocation2 + $0x8] sm:$0x1]
      %v879 = vsel %vm755, %v808, %v878
      %880 = vst [vmem:[#allocation2 + $0x8] sm:$0x1] %v879
      %v881 = vld [vmem:[#allocation2 + $0xc] sm:$0xf]
      %v882 = vsel %vm873, %v815, %v881
      %883 = vst [vmem:[#allocation2 + $0xc] sm:$0xf] %v882
      %884 = vst [vmem:[#allocation2 + $0x10] sm:$0xf] %v824
      %v885 = vld [vmem:[#allocation2 + $0x14] sm:$0x1]
      %v886 = vsel %vm755, %v825, %v885
      %887 = vst [vmem:[#allocation2 + $0x14] sm:$0x1] %v886
      %v888 = vld [vmem:[#allocation2 + $0x18] sm:$0xf]
      %v889 = vsel %vm873, %v832, %v888
      %890 = vst [vmem:[#allocation2 + $0x18] sm:$0xf] %v889
      %891 = vst [vmem:[#allocation2 + $0x1c] sm:$0xf] %v841
      %v892 = vld [vmem:[#allocation2 + $0x20] sm:$0x1]
      %v893 = vsel %vm755, %v842, %v892
      %894 = vst [vmem:[#allocation2 + $0x20] sm:$0x1] %v893
      %v895 = vld [vmem:[#allocation2 + $0x24] sm:$0xf]
      %v896 = vsel %vm873, %v849, %v895
      %897 = vst [vmem:[#allocation2 + $0x24] sm:$0xf] %v896
      %898 = vst [vmem:[#allocation2 + $0x28] sm:$0xf] %v858
      %v899 = vld [vmem:[#allocation2 + $0x2c] sm:$0x1]
      %v900 = vsel %vm755, %v859, %v899
      %901 = vst [vmem:[#allocation2 + $0x2c] sm:$0x1] %v900
      %v902 = vld [vmem:[#allocation2] sm:$0xf]
      %v903 = vld [vmem:[#allocation2 + $0x4] sm:$0xf]
      %v904 = vld [vmem:[#allocation2 + $0xc] sm:$0xf]
      %v905 = vld [vmem:[#allocation2 + $0x10] sm:$0xf]
      %v906 = vld [vmem:[#allocation2 + $0x18] sm:$0xf]
      %v907 = vld [vmem:[#allocation2 + $0x1c] sm:$0xf]
      %v908 = vld [vmem:[#allocation2 + $0x24] sm:$0xf]
      %v909 = vld [vmem:[#allocation2 + $0x28] sm:$0xf]
      %v910 = vld [vmem:[%s3] sm:$0xf]
      %v911 = vld [vmem:[%s3 + $0x4] sm:$0xf]
      %v912 = vld [vmem:[%s3 + $0x8] sm:$0xf]
      %v913 = vld [vmem:[%s3 + $0xc] sm:$0xf]
      %v914 = vld [vmem:[%s3 + $0x10] sm:$0xf]
      %v915 = vld [vmem:[%s3 + $0x14] sm:$0xf]
      %v916 = vld [vmem:[%s3 + $0x18] sm:$0xf]
      %v917 = vld [vmem:[%s3 + $0x1c] sm:$0xf]
      %v918 = vld [vmem:[%s3 + $0x20] sm:$0xf]
      %v919 = vld [vmem:[%s3 + $0x24] sm:$0xf]
      %v920 = vld [vmem:[%s3 + $0x28] sm:$0xf]
      %v921 = vld [vmem:[%s3 + $0x2c] sm:$0xf]
      %v922 = vld [vmem:[%s3 + $0x30] sm:$0xf]
      %v923 = vld [vmem:[%s3 + $0x34] sm:$0xf]
      %v924 = vld [vmem:[%s3 + $0x38] sm:$0xf]
      %v925 = vld [vmem:[%s3 + $0x3c] sm:$0xf]
      %v926 = vld [vmem:[#allocation2 + $0x8] sm:$0x1]
      %v927 = vld [vmem:[#allocation2 + $0x14] sm:$0x1]
      %v928 = vld [vmem:[#allocation2 + $0x20] sm:$0x1]
      %v929 = vld [vmem:[#allocation2 + $0x2c] sm:$0x1]
      %v931 = vshrl.u32 %v902, 16
      %v933 = vrot.slane %v931, 4
      %v934 = vshll.u32 %v902, 16
      %v936 = vrot.slane %v934, 5
      %v937 = vor.u32 %v933, %v936
      %v938 = vrot.slane %v937, 4
      %v940 = vshll.u32 %v903, 16
      %v942 = vrot.slane %v940, 5
      %v943 = vsel %vm264, %v938, %v942
      %v944 = vshrl.u32 %v903, 16
      %v946 = vrot.slane %v944, 4
      %v947 = vor.u32 %v946, %v942
      %v948 = vrot.slane %v947, 4
      %v950 = vshll.u32 %v926, 16
      %v952 = vrot.slane %v950, 5
      %v953 = vsel %vm264, %v948, %v952
      %v955 = vshrl.u32 %v904, 16
      %v957 = vrot.slane %v955, 4
      %v958 = vshll.u32 %v904, 16
      %v960 = vrot.slane %v958, 5
      %v961 = vor.u32 %v957, %v960
      %v962 = vrot.slane %v961, 4
      %v964 = vshll.u32 %v905, 16
      %v966 = vrot.slane %v964, 5
      %v967 = vsel %vm264, %v962, %v966
      %v968 = vshrl.u32 %v905, 16
      %v970 = vrot.slane %v968, 4
      %v971 = vor.u32 %v970, %v966
      %v972 = vrot.slane %v971, 4
      %v974 = vshll.u32 %v927, 16
      %v976 = vrot.slane %v974, 5
      %v977 = vsel %vm264, %v972, %v976
      %v979 = vshrl.u32 %v906, 16
      %v981 = vrot.slane %v979, 4
      %v982 = vshll.u32 %v906, 16
      %v984 = vrot.slane %v982, 5
      %v985 = vor.u32 %v981, %v984
      %v986 = vrot.slane %v985, 4
      %v988 = vshll.u32 %v907, 16
      %v990 = vrot.slane %v988, 5
      %v991 = vsel %vm264, %v986, %v990
      %v992 = vshrl.u32 %v907, 16
      %v994 = vrot.slane %v992, 4
      %v995 = vor.u32 %v994, %v990
      %v996 = vrot.slane %v995, 4
      %v998 = vshll.u32 %v928, 16
      %v1000 = vrot.slane %v998, 5
      %v1001 = vsel %vm264, %v996, %v1000
      %v1003 = vshrl.u32 %v908, 16
      %v1005 = vrot.slane %v1003, 4
      %v1006 = vshll.u32 %v908, 16
      %v1008 = vrot.slane %v1006, 5
      %v1009 = vor.u32 %v1005, %v1008
      %v1010 = vrot.slane %v1009, 4
      %v1012 = vshll.u32 %v909, 16
      %v1014 = vrot.slane %v1012, 5
      %v1015 = vsel %vm264, %v1010, %v1014
      %v1016 = vshrl.u32 %v909, 16
      %v1018 = vrot.slane %v1016, 4
      %v1019 = vor.u32 %v1018, %v1014
      %v1020 = vrot.slane %v1019, 4
      %v1022 = vshll.u32 %v929, 16
      %v1024 = vrot.slane %v1022, 5
      %v1025 = vsel %vm264, %v1020, %v1024
      %s1026 = scalar_lea.vmem %s3, 64
      %v1027 = vld [vmem:[%s1026] sm:$0xf]
      %v1028 = vld [vmem:[%s1026 + $0x4] sm:$0xf]
      %v1029 = vld [vmem:[%s1026 + $0x8] sm:$0xf]
      %v1030 = vld [vmem:[%s1026 + $0xc] sm:$0xf]
      %v1031 = vld [vmem:[%s1026 + $0x10] sm:$0xf]
      %v1032 = vld [vmem:[%s1026 + $0x14] sm:$0xf]
      %v1033 = vld [vmem:[%s1026 + $0x18] sm:$0xf]
      %v1034 = vld [vmem:[%s1026 + $0x1c] sm:$0xf]
      %v1035 = vld [vmem:[%s1026 + $0x20] sm:$0xf]
      %v1036 = vld [vmem:[%s1026 + $0x24] sm:$0xf]
      %v1037 = vld [vmem:[%s1026 + $0x28] sm:$0xf]
      %v1038 = vld [vmem:[%s1026 + $0x2c] sm:$0xf]
      %v1039 = vld [vmem:[%s1026 + $0x30] sm:$0xf]
      %v1040 = vld [vmem:[%s1026 + $0x34] sm:$0xf]
      %v1041 = vld [vmem:[%s1026 + $0x38] sm:$0xf]
      %v1042 = vld [vmem:[%s1026 + $0x3c] sm:$0xf]
      %v1043 = vunpack.c.l.b16 %v943
      %v1044 = vunpack.c.l.b16 %v953
      %v1045 = vunpack.c.l.b16 %v967
      %v1046 = vunpack.c.l.b16 %v977
      %v1047 = vunpack.c.l.b16 %v991
      %v1048 = vunpack.c.l.b16 %v1001
      %v1049 = vunpack.c.l.b16 %v1015
      %v1050 = vunpack.c.l.b16 %v1025
      %v1051 = vpack.c.b16 %v1044, %v1043
      %v1052 = vpack.c.b16 %v1046, %v1045
      %v1053 = vpack.c.b16 %v1048, %v1047
      %v1054 = vpack.c.b16 %v1050, %v1049
      %v1075 = vunpack.c.l.b16 %v1027
      %v1076 = vunpack.c.l.b16 %v1028
      %v1077 = vunpack.c.l.b16 %v1029
      %v1078 = vunpack.c.l.b16 %v1030
      %v1079 = vunpack.c.l.b16 %v1031
      %v1080 = vunpack.c.l.b16 %v1032
      %v1081 = vunpack.c.l.b16 %v1033
      %v1082 = vunpack.c.l.b16 %v1034
      %v1083 = vunpack.c.l.b16 %v1035
      %v1084 = vunpack.c.l.b16 %v1036
      %v1085 = vunpack.c.l.b16 %v1037
      %v1086 = vunpack.c.l.b16 %v1038
      %v1087 = vunpack.c.l.b16 %v1039
      %v1088 = vunpack.c.l.b16 %v1040
      %v1089 = vunpack.c.l.b16 %v1041
      %v1090 = vunpack.c.l.b16 %v1042
      %v1091 = vpack.c.b16 %v1076, %v1075
      %v1092 = vpack.c.b16 %v1078, %v1077
      %v1093 = vpack.c.b16 %v1080, %v1079
      %v1094 = vpack.c.b16 %v1082, %v1081
      %v1095 = vpack.c.b16 %v1084, %v1083
      %v1096 = vpack.c.b16 %v1086, %v1085
      %v1097 = vpack.c.b16 %v1088, %v1087
      %v1098 = vpack.c.b16 %v1090, %v1089
      %1107 = vmatpush.bf16.msra.mxu0 %v1098
      %1108 = vmatpush.bf16.msra.mxu0 %v1097
      %1109 = vmatpush.bf16.msra.mxu0 %v1096
      %1110 = vmatpush.bf16.msra.mxu0 %v1095
      %1111 = vmatpush.bf16.msra.mxu0 %v1094
      %1112 = vmatpush.bf16.msra.mxu0 %v1093
      %1113 = vmatpush.bf16.msra.mxu0 %v1092
      %1114 = vmatpush.bf16.msra.mxu0 %v1091
      %1115 = vmatmul.bf16.gmra.mxu0 %v1051
      %v1116 = vpop.f32.mrf.mxu0
      %v1117 = vadd.f32 0.0, %v1116
      %v1118 = vpop.f32.mrf.mxu0
      %v1119 = vadd.f32 0.0, %v1118
      %1120 = vmatmul.bf16.gmra.mxu0 %v1052
      %v1121 = vpop.f32.mrf.mxu0
      %v1122 = vadd.f32 0.0, %v1121
      %v1123 = vpop.f32.mrf.mxu0
      %v1124 = vadd.f32 0.0, %v1123
      %1125 = vmatmul.bf16.gmra.mxu0 %v1053
      %v1126 = vpop.f32.mrf.mxu0
      %v1127 = vadd.f32 0.0, %v1126
      %v1128 = vpop.f32.mrf.mxu0
      %v1129 = vadd.f32 0.0, %v1128
      %1130 = vmatmul.bf16.gmra.mxu0 %v1054
      %v1131 = vpop.f32.mrf.mxu0
      %v1132 = vadd.f32 0.0, %v1131
      %v1133 = vpop.f32.mrf.mxu0
      %v1134 = vadd.f32 0.0, %v1133
      %1135 = vdwg.mxu0
      %v1144 = vunpack.c.l.b16 %v902
      %v1145 = vunpack.c.l.b16 %v903
      %v1146 = vunpack.c.l.b16 %v904
      %v1147 = vunpack.c.l.b16 %v905
      %v1148 = vunpack.c.l.b16 %v906
      %v1149 = vunpack.c.l.b16 %v907
      %v1150 = vunpack.c.l.b16 %v908
      %v1151 = vunpack.c.l.b16 %v909
      %v1152 = vpack.c.b16 %v1145, %v1144
      %v1153 = vpack.c.b16 %v1147, %v1146
      %v1154 = vpack.c.b16 %v1149, %v1148
      %v1155 = vpack.c.b16 %v1151, %v1150
      %v1176 = vunpack.c.l.b16 %v910
      %v1177 = vunpack.c.l.b16 %v911
      %v1178 = vunpack.c.l.b16 %v912
      %v1179 = vunpack.c.l.b16 %v913
      %v1180 = vunpack.c.l.b16 %v914
      %v1181 = vunpack.c.l.b16 %v915
      %v1182 = vunpack.c.l.b16 %v916
      %v1183 = vunpack.c.l.b16 %v917
      %v1184 = vunpack.c.l.b16 %v918
      %v1185 = vunpack.c.l.b16 %v919
      %v1186 = vunpack.c.l.b16 %v920
      %v1187 = vunpack.c.l.b16 %v921
      %v1188 = vunpack.c.l.b16 %v922
      %v1189 = vunpack.c.l.b16 %v923
      %v1190 = vunpack.c.l.b16 %v924
      %v1191 = vunpack.c.l.b16 %v925
      %v1192 = vpack.c.b16 %v1177, %v1176
      %v1193 = vpack.c.b16 %v1179, %v1178
      %v1194 = vpack.c.b16 %v1181, %v1180
      %v1195 = vpack.c.b16 %v1183, %v1182
      %v1196 = vpack.c.b16 %v1185, %v1184
      %v1197 = vpack.c.b16 %v1187, %v1186
      %v1198 = vpack.c.b16 %v1189, %v1188
      %v1199 = vpack.c.b16 %v1191, %v1190
      %1208 = vmatpush.bf16.msra.mxu0 %v1199
      %1209 = vmatpush.bf16.msra.mxu0 %v1198
      %1210 = vmatpush.bf16.msra.mxu0 %v1197
      %1211 = vmatpush.bf16.msra.mxu0 %v1196
      %1212 = vmatpush.bf16.msra.mxu0 %v1195
      %1213 = vmatpush.bf16.msra.mxu0 %v1194
      %1214 = vmatpush.bf16.msra.mxu0 %v1193
      %1215 = vmatpush.bf16.msra.mxu0 %v1192
      %1216 = vmatmul.bf16.gmra.mxu0 %v1152
      %v1217 = vpop.f32.mrf.mxu0
      %v1218 = vadd.f32 %v1117, %v1217
      %v1219 = vpop.f32.mrf.mxu0
      %v1220 = vadd.f32 %v1119, %v1219
      %1221 = vmatmul.bf16.gmra.mxu0 %v1153
      %v1222 = vpop.f32.mrf.mxu0
      %v1223 = vadd.f32 %v1122, %v1222
      %v1224 = vpop.f32.mrf.mxu0
      %v1225 = vadd.f32 %v1124, %v1224
      %1226 = vmatmul.bf16.gmra.mxu0 %v1154
      %v1227 = vpop.f32.mrf.mxu0
      %v1228 = vadd.f32 %v1127, %v1227
      %v1229 = vpop.f32.mrf.mxu0
      %v1230 = vadd.f32 %v1129, %v1229
      %1231 = vmatmul.bf16.gmra.mxu0 %v1155
      %v1232 = vpop.f32.mrf.mxu0
      %v1233 = vadd.f32 %v1132, %v1232
      %v1234 = vpop.f32.mrf.mxu0
      %v1235 = vadd.f32 %v1134, %v1234
      %1236 = vdwg.mxu0
      %v1237 = vld [vmem:[#allocation2] sm:$0xe]
      %v1238 = vld [vmem:[#allocation2 + $0xc] sm:$0xe]
      %v1239 = vld [vmem:[#allocation2 + $0x18] sm:$0xe]
      %v1240 = vld [vmem:[#allocation2 + $0x24] sm:$0xe]
      %v1249 = vrot.slane %v1237, 5
      %v1250 = vrot.slane %v1249, 4
      %v1251 = vrot.slane %v903, 5
      %v1252 = vsel %vm586, %v1250, %v1251
      %v1253 = vrot.slane %v1251, 4
      %v1254 = vrot.slane %v926, 5
      %v1255 = vsel %vm586, %v1253, %v1254
      %v1256 = vrot.slane %v1238, 5
      %v1257 = vrot.slane %v1256, 4
      %v1258 = vrot.slane %v905, 5
      %v1259 = vsel %vm586, %v1257, %v1258
      %v1260 = vrot.slane %v1258, 4
      %v1261 = vrot.slane %v927, 5
      %v1262 = vsel %vm586, %v1260, %v1261
      %v1263 = vrot.slane %v1239, 5
      %v1264 = vrot.slane %v1263, 4
      %v1265 = vrot.slane %v907, 5
      %v1266 = vsel %vm586, %v1264, %v1265
      %v1267 = vrot.slane %v1265, 4
      %v1268 = vrot.slane %v928, 5
      %v1269 = vsel %vm586, %v1267, %v1268
      %v1270 = vrot.slane %v1240, 5
      %v1271 = vrot.slane %v1270, 4
      %v1272 = vrot.slane %v909, 5
      %v1273 = vsel %vm586, %v1271, %v1272
      %v1274 = vrot.slane %v1272, 4
      %v1275 = vrot.slane %v929, 5
      %v1276 = vsel %vm586, %v1274, %v1275
      %s1277 = scalar_lea.vmem %s3, 128
      %v1278 = vld [vmem:[%s1277] sm:$0xf]
      %v1279 = vld [vmem:[%s1277 + $0x4] sm:$0xf]
      %v1280 = vld [vmem:[%s1277 + $0x8] sm:$0xf]
      %v1281 = vld [vmem:[%s1277 + $0xc] sm:$0xf]
      %v1282 = vld [vmem:[%s1277 + $0x10] sm:$0xf]
      %v1283 = vld [vmem:[%s1277 + $0x14] sm:$0xf]
      %v1284 = vld [vmem:[%s1277 + $0x18] sm:$0xf]
      %v1285 = vld [vmem:[%s1277 + $0x1c] sm:$0xf]
      %v1286 = vld [vmem:[%s1277 + $0x20] sm:$0xf]
      %v1287 = vld [vmem:[%s1277 + $0x24] sm:$0xf]
      %v1288 = vld [vmem:[%s1277 + $0x28] sm:$0xf]
      %v1289 = vld [vmem:[%s1277 + $0x2c] sm:$0xf]
      %v1290 = vld [vmem:[%s1277 + $0x30] sm:$0xf]
      %v1291 = vld [vmem:[%s1277 + $0x34] sm:$0xf]
      %v1292 = vld [vmem:[%s1277 + $0x38] sm:$0xf]
      %v1293 = vld [vmem:[%s1277 + $0x3c] sm:$0xf]
      %v1294 = vunpack.c.l.b16 %v1252
      %v1295 = vunpack.c.l.b16 %v1255
      %v1296 = vunpack.c.l.b16 %v1259
      %v1297 = vunpack.c.l.b16 %v1262
      %v1298 = vunpack.c.l.b16 %v1266
      %v1299 = vunpack.c.l.b16 %v1269
      %v1300 = vunpack.c.l.b16 %v1273
      %v1301 = vunpack.c.l.b16 %v1276
      %v1302 = vpack.c.b16 %v1295, %v1294
      %v1303 = vpack.c.b16 %v1297, %v1296
      %v1304 = vpack.c.b16 %v1299, %v1298
      %v1305 = vpack.c.b16 %v1301, %v1300
      %v1326 = vunpack.c.l.b16 %v1278
      %v1327 = vunpack.c.l.b16 %v1279
      %v1328 = vunpack.c.l.b16 %v1280
      %v1329 = vunpack.c.l.b16 %v1281
      %v1330 = vunpack.c.l.b16 %v1282
      %v1331 = vunpack.c.l.b16 %v1283
      %v1332 = vunpack.c.l.b16 %v1284
      %v1333 = vunpack.c.l.b16 %v1285
      %v1334 = vunpack.c.l.b16 %v1286
      %v1335 = vunpack.c.l.b16 %v1287
      %v1336 = vunpack.c.l.b16 %v1288
      %v1337 = vunpack.c.l.b16 %v1289
      %v1338 = vunpack.c.l.b16 %v1290
      %v1339 = vunpack.c.l.b16 %v1291
      %v1340 = vunpack.c.l.b16 %v1292
      %v1341 = vunpack.c.l.b16 %v1293
      %v1342 = vpack.c.b16 %v1327, %v1326
      %v1343 = vpack.c.b16 %v1329, %v1328
      %v1344 = vpack.c.b16 %v1331, %v1330
      %v1345 = vpack.c.b16 %v1333, %v1332
      %v1346 = vpack.c.b16 %v1335, %v1334
      %v1347 = vpack.c.b16 %v1337, %v1336
      %v1348 = vpack.c.b16 %v1339, %v1338
      %v1349 = vpack.c.b16 %v1341, %v1340
      %1358 = vmatpush.bf16.msra.mxu0 %v1349
      %1359 = vmatpush.bf16.msra.mxu0 %v1348
      %1360 = vmatpush.bf16.msra.mxu0 %v1347
      %1361 = vmatpush.bf16.msra.mxu0 %v1346
      %1362 = vmatpush.bf16.msra.mxu0 %v1345
      %1363 = vmatpush.bf16.msra.mxu0 %v1344
      %1364 = vmatpush.bf16.msra.mxu0 %v1343
      %1365 = vmatpush.bf16.msra.mxu0 %v1342
      %1366 = vmatmul.bf16.gmra.mxu0 %v1302
      %v1367 = vpop.f32.mrf.mxu0
      %v1368 = vadd.f32 0.0, %v1367
      %v1369 = vpop.f32.mrf.mxu0
      %v1370 = vadd.f32 0.0, %v1369
      %1371 = vmatmul.bf16.gmra.mxu0 %v1303
      %v1372 = vpop.f32.mrf.mxu0
      %v1373 = vadd.f32 0.0, %v1372
      %v1374 = vpop.f32.mrf.mxu0
      %v1375 = vadd.f32 0.0, %v1374
      %1376 = vmatmul.bf16.gmra.mxu0 %v1304
      %v1377 = vpop.f32.mrf.mxu0
      %v1378 = vadd.f32 0.0, %v1377
      %v1379 = vpop.f32.mrf.mxu0
      %v1380 = vadd.f32 0.0, %v1379
      %1381 = vmatmul.bf16.gmra.mxu0 %v1305
      %v1382 = vpop.f32.mrf.mxu0
      %v1383 = vadd.f32 0.0, %v1382
      %v1384 = vpop.f32.mrf.mxu0
      %v1385 = vadd.f32 0.0, %v1384
      %1386 = vdwg.mxu0
      %v1387 = vadd.f32 %v1218, %v1368
      %v1388 = vadd.f32 %v1220, %v1370
      %v1389 = vadd.f32 %v1223, %v1373
      %v1390 = vadd.f32 %v1225, %v1375
      %v1391 = vadd.f32 %v1228, %v1378
      %v1392 = vadd.f32 %v1230, %v1380
      %v1393 = vadd.f32 %v1233, %v1383
      %v1394 = vadd.f32 %v1235, %v1385
      %v1395 = vld [vmem:[%s4] sm:$0x1]
      %v1397 = vperm.slane %v1395, 0
      %v1399 = vadd.f32 %v1387, %v1397
      %v1400 = vadd.f32 %v1388, %v1397
      %v1401 = vadd.f32 %v1389, %v1397
      %v1402 = vadd.f32 %v1390, %v1397
      %v1403 = vadd.f32 %v1391, %v1397
      %v1404 = vadd.f32 %v1392, %v1397
      %v1405 = vadd.f32 %v1393, %v1397
      %v1406 = vadd.f32 %v1394, %v1397
      %v1407 = vld [vmem:[%s224] sm:$0xf]
      %v1408 = vld [vmem:[%s224 + $0x4] sm:$0xf]
      %v1409 = vld [vmem:[%s224 + $0x8] sm:$0x1]
      %v1410 = vld [vmem:[%s224 + $0xc] sm:$0xf]
      %v1411 = vld [vmem:[%s224 + $0x10] sm:$0xf]
      %v1412 = vld [vmem:[%s224 + $0x14] sm:$0x1]
      %v1413 = vld [vmem:[%s224 + $0x18] sm:$0xf]
      %v1414 = vld [vmem:[%s224 + $0x1c] sm:$0xf]
      %v1415 = vld [vmem:[%s224 + $0x20] sm:$0x1]
      %v1416 = vld [vmem:[%s224 + $0x24] sm:$0xf]
      %v1417 = vld [vmem:[%s224 + $0x28] sm:$0xf]
      %v1418 = vld [vmem:[%s224 + $0x2c] sm:$0x1]
      %v1420 = vshrl.u32 %v1407, 16
      %v1422 = vrot.slane %v1420, 4
      %v1423 = vshll.u32 %v1407, 16
      %v1425 = vrot.slane %v1423, 5
      %v1426 = vor.u32 %v1422, %v1425
      %v1427 = vrot.slane %v1426, 4
      %v1429 = vshll.u32 %v1408, 16
      %v1431 = vrot.slane %v1429, 5
      %v1432 = vsel %vm264, %v1427, %v1431
      %v1433 = vshrl.u32 %v1408, 16
      %v1435 = vrot.slane %v1433, 4
      %v1436 = vor.u32 %v1435, %v1431
      %v1437 = vrot.slane %v1436, 4
      %v1439 = vshll.u32 %v1409, 16
      %v1441 = vrot.slane %v1439, 5
      %v1442 = vsel %vm264, %v1437, %v1441
      %v1444 = vshrl.u32 %v1410, 16
      %v1446 = vrot.slane %v1444, 4
      %v1447 = vshll.u32 %v1410, 16
      %v1449 = vrot.slane %v1447, 5
      %v1450 = vor.u32 %v1446, %v1449
      %v1451 = vrot.slane %v1450, 4
      %v1453 = vshll.u32 %v1411, 16
      %v1455 = vrot.slane %v1453, 5
      %v1456 = vsel %vm264, %v1451, %v1455
      %v1457 = vshrl.u32 %v1411, 16
      %v1459 = vrot.slane %v1457, 4
      %v1460 = vor.u32 %v1459, %v1455
      %v1461 = vrot.slane %v1460, 4
      %v1463 = vshll.u32 %v1412, 16
      %v1465 = vrot.slane %v1463, 5
      %v1466 = vsel %vm264, %v1461, %v1465
      %v1468 = vshrl.u32 %v1413, 16
      %v1470 = vrot.slane %v1468, 4
      %v1471 = vshll.u32 %v1413, 16
      %v1473 = vrot.slane %v1471, 5
      %v1474 = vor.u32 %v1470, %v1473
      %v1475 = vrot.slane %v1474, 4
      %v1477 = vshll.u32 %v1414, 16
      %v1479 = vrot.slane %v1477, 5
      %v1480 = vsel %vm264, %v1475, %v1479
      %v1481 = vshrl.u32 %v1414, 16
      %v1483 = vrot.slane %v1481, 4
      %v1484 = vor.u32 %v1483, %v1479
      %v1485 = vrot.slane %v1484, 4
      %v1487 = vshll.u32 %v1415, 16
      %v1489 = vrot.slane %v1487, 5
      %v1490 = vsel %vm264, %v1485, %v1489
      %v1492 = vshrl.u32 %v1416, 16
      %v1494 = vrot.slane %v1492, 4
      %v1495 = vshll.u32 %v1416, 16
      %v1497 = vrot.slane %v1495, 5
      %v1498 = vor.u32 %v1494, %v1497
      %v1499 = vrot.slane %v1498, 4
      %v1501 = vshll.u32 %v1417, 16
      %v1503 = vrot.slane %v1501, 5
      %v1504 = vsel %vm264, %v1499, %v1503
      %v1505 = vshrl.u32 %v1417, 16
      %v1507 = vrot.slane %v1505, 4
      %v1508 = vor.u32 %v1507, %v1503
      %v1509 = vrot.slane %v1508, 4
      %v1511 = vshll.u32 %v1418, 16
      %v1513 = vrot.slane %v1511, 5
      %v1514 = vsel %vm264, %v1509, %v1513
      %v1523 = vunpack.c.l.bf16 %v1432
      %v1524 = vunpack.c.l.bf16 %v1442
      %v1525 = vunpack.c.l.bf16 %v1456
      %v1526 = vunpack.c.l.bf16 %v1466
      %v1527 = vunpack.c.l.bf16 %v1480
      %v1528 = vunpack.c.l.bf16 %v1490
      %v1529 = vunpack.c.l.bf16 %v1504
      %v1530 = vunpack.c.l.bf16 %v1514
      %v1531 = vadd.f32 %v1399, %v1523
      %v1532 = vadd.f32 %v1400, %v1524
      %v1533 = vadd.f32 %v1401, %v1525
      %v1534 = vadd.f32 %v1402, %v1526
      %v1535 = vadd.f32 %v1403, %v1527
      %v1536 = vadd.f32 %v1404, %v1528
      %v1537 = vadd.f32 %v1405, %v1529
      %v1538 = vadd.f32 %v1406, %v1530
      %v1539 = vmax.f32 %v1531, 0.0
      %v1540 = vmax.f32 %v1532, 0.0
      %v1541 = vmax.f32 %v1533, 0.0
      %v1542 = vmax.f32 %v1534, 0.0
      %v1543 = vmax.f32 %v1535, 0.0
      %v1544 = vmax.f32 %v1536, 0.0
      %v1545 = vmax.f32 %v1537, 0.0
      %v1546 = vmax.f32 %v1538, 0.0
      %v1547 = vpack.c.bf16 %v1539, %v1539
      %v1548 = vpack.c.bf16 %v1540, %v1540
      %v1549 = vpack.c.bf16 %v1541, %v1541
      %v1550 = vpack.c.bf16 %v1542, %v1542
      %v1551 = vpack.c.bf16 %v1543, %v1543
      %v1552 = vpack.c.bf16 %v1544, %v1544
      %v1553 = vpack.c.bf16 %v1545, %v1545
      %v1554 = vpack.c.bf16 %v1546, %v1546
      %1555 = vst [vmem:[%s231] sm:$0xf] %v1547
      %1556 = vst [vmem:[%s231 + $0x4] sm:$0xf] %v1548
      %1557 = vst [vmem:[%s231 + $0x8] sm:$0xf] %v1549
      %1558 = vst [vmem:[%s231 + $0xc] sm:$0xf] %v1550
      %1559 = vst [vmem:[%s231 + $0x10] sm:$0xf] %v1551
      %1560 = vst [vmem:[%s231 + $0x14] sm:$0xf] %v1552
      %1561 = vst [vmem:[%s231 + $0x18] sm:$0xf] %v1553
      %1562 = vst [vmem:[%s231 + $0x1c] sm:$0xf] %v1554
      %s1563 = smul.u32 4, %s16
      %p1564 = scmp.lt.s32.totalorder %s1563, 7
      %s1565 = scalar_select %p1564, %s1563, 7
      %s1566 = smul.addr %s1565, 2
      %s1567 = smul.addr %s1566, 4
      %s1568 = scalar_lea.vmem %s5, %s1567
      // Predicated region
      $region41: #{basic_block_pallas.1} parent=39 // pred_check
        %p1569 = pneg %p144
      $region42: #{basic_block_pallas.1} parent=39 // pred_check_branch
        %1571 = sbr.rel (%p1569) target = $region44
      $region43: #{basic_block_pallas.1} parent=39 // pred_region
        %s1572 = smul.u32 4, %s16
      $region44: #{basic_block_pallas.1} parent=39 // pred_fallthru
        _
    $region40: #{basic_block_pallas.1} parent=5 // pred_fallthru
      _
    %p1573 = scmp.le.s32.totalorder 2, %s11
    // Predicated region
    $region45: #{basic_block_pallas.1} parent=5 // pred_check
      %p1574 = pneg %p1573
    $region46: #{basic_block_pallas.1} parent=5 // pred_check_branch
      %1576 = sbr.rel (%p1574) target = $region48
    $region47: #{basic_block_pallas.1} parent=5 // pred_region
      %s1577 = ssub.s32 %s11, 2
      // Predicated region
      $region49: #{basic_block_pallas.1} parent=47 // pred_check
        %p1578 = pneg %p150
      $region50: #{basic_block_pallas.1} parent=47 // pred_check_branch
        %1580 = sbr.rel (%p1578) target = $region52
      $region51: #{basic_block_pallas.1} parent=47 // pred_region
        %s1581 = smul.u32 4, %s17
        %p1582 = scmp.lt.s32.totalorder %s1581, 7
        %s1583 = scalar_select %p1582, %s1581, 7
        %s1584 = smul.addr %s1583, 2
        %s1585 = smul.addr %s1584, 4
        %s1586 = scalar_lea.vmem %s5, %s1585
      $region52: #{basic_block_pallas.1} parent=47 // pred_fallthru
        _
    $region48: #{basic_block_pallas.1} parent=5 // pred_fallthru
      _
  $region6: #{basic_block_pallas.1} parent=0 // loop_footer
    %s15 = sadd.s32 1, %s11
  $region7: #{basic_block_pallas.1} parent=0 // loop_footer_branch
    %10 = sbr.rel target = $region3
  $region8: #{basic_block_pallas.1} parent=0 // loop_exit
    _

</llo_original>
